<compile_context>
chip_gen: v7x
topology: tpu7x:2x2x1
jax: 0.10.0
libtpu: 0.0.40
codegen_flags: <defaults>
</compile_context>

<pallas_src>
import functools

import jax
import jax.numpy as jnp
from jax import lax
from jax.experimental import pallas as pl
from jax.experimental.pallas import tpu as pltpu


def conv_bn_kernel(x_ref, w_ref, gamma_ref, beta_ref, o_ref, *, inv_m, eps):
    # 1x1 conv == matmul: [M, Cin] @ [Cin, TN] -> [M, TN].
    # bf16 operands, f32 accumulation on the MXU (no f32 emulation passes).
    y = jnp.dot(x_ref[...], w_ref[...], preferred_element_type=jnp.float32)

    # Stage the raw matmul result in the VMEM output buffer so the full
    # [M, TN] f32 tile does not have to stay resident in vregs across the
    # BN-statistics epilogue (TN=1152 -> ~55 vregs otherwise).
    o_ref[...] = y
    y = o_ref[...]

    # One-pass batch statistics over the rows (N*H*W) of this Cout block.
    mean = jnp.sum(y, axis=0, keepdims=True) * inv_m             # [1, TN]
    mean_sq = jnp.sum(y * y, axis=0, keepdims=True) * inv_m      # [1, TN]
    var = mean_sq - mean * mean                                  # biased variance
    inv = lax.rsqrt(var + eps)

    # Fold BN into per-channel scale/shift: y*scale + shift.
    scale = gamma_ref[...] * inv                                 # [1, TN]
    shift = beta_ref[...] - mean * scale                         # [1, TN]
    o_ref[...] = y * scale + shift


def conv2d_1x1_batchnorm(x_nchw, w_oi, gamma, beta, *, eps=1e-5, tn=None):
    """x_nchw: [N, Cin, H, W]; w_oi: [Cout, Cin]; gamma/beta: [Cout]."""
    N, Cin, H, W = x_nchw.shape
    Cout = w_oi.shape[0]
    M = N * H * W

    # Single Cout block by default.  If a tn is given it must divide Cout and
    # be a multiple of 128 (lane rule); otherwise fall back to the full Cout.
    if tn is None or Cout % tn != 0 or tn % 128 != 0:
        tn = Cout

    # Channels-last flatten: [M, Cin]; bf16 matmul operands, f32 BN params.
    x_rows = jnp.transpose(x_nchw, (0, 2, 3, 1)).reshape(M, Cin).astype(jnp.bfloat16)
    w_mat = jnp.transpose(w_oi, (1, 0)).astype(jnp.bfloat16)            # [Cin, Cout]
    gamma2 = gamma.reshape(1, Cout).astype(jnp.float32)
    beta2 = beta.reshape(1, Cout).astype(jnp.float32)

    kernel = functools.partial(conv_bn_kernel, inv_m=1.0 / M, eps=eps)

    out = pl.pallas_call(
        kernel,
        out_shape=jax.ShapeDtypeStruct((M, Cout), jnp.float32),
        grid=(Cout // tn,),
        in_specs=[
            pl.BlockSpec((M, Cin), lambda j: (0, 0)),   # full activation, reused
            pl.BlockSpec((Cin, tn), lambda j: (0, j)),  # weight Cout tile
            pl.BlockSpec((1, tn), lambda j: (0, j)),    # gamma tile (full vec when tn=Cout)
            pl.BlockSpec((1, tn), lambda j: (0, j)),    # beta tile
        ],
        out_specs=pl.BlockSpec((M, tn), lambda j: (0, j)),
        compiler_params=pltpu.CompilerParams(
            dimension_semantics=("parallel",),
        ),
    )(x_rows, w_mat, gamma2, beta2)

    out = out.reshape(N, H, W, Cout)
    return jnp.transpose(out, (0, 3, 1, 2))                             # back to NCHW


if __name__ == "__main__":
    key = jax.random.PRNGKey(0)
    k_x, k_w, k_g, k_b = jax.random.split(key, 4)

    # Shapes implied by the module: Conv2d(192 -> 1152, 1x1), input [1, 192, 7, 7].
    N, Cin, H, W, Cout = 1, 192, 7, 7, 1152
    x = jax.random.normal(k_x, (N, Cin, H, W), dtype=jnp.float32)
    w = jax.random.normal(k_w, (Cout, Cin), dtype=jnp.float32) * 0.05   # [Cout,Cin,1,1] squeezed
    gamma = 1.0 + 0.1 * jax.random.normal(k_g, (Cout,), dtype=jnp.float32)
    beta = 0.1 * jax.random.normal(k_b, (Cout,), dtype=jnp.float32)

    y = conv2d_1x1_batchnorm(x, w, gamma, beta, eps=1e-5)
    y = jax.block_until_ready(y)

    # Apples-to-apples reference: same bf16-quantized operands, f32 accumulation,
    # same one-pass biased-variance BN.
    xr = jnp.transpose(x, (0, 2, 3, 1)).reshape(-1, Cin).astype(jnp.bfloat16)
    wr = jnp.transpose(w, (1, 0)).astype(jnp.bfloat16)
    yr = jnp.dot(xr, wr, preferred_element_type=jnp.float32)
    mean = yr.mean(axis=0, keepdims=True)
    var = (yr * yr).mean(axis=0, keepdims=True) - mean * mean
    yr = (yr - mean) * lax.rsqrt(var + 1e-5) * gamma + beta
    yr = jnp.transpose(yr.reshape(N, H, W, Cout), (0, 3, 1, 2))

    assert y.shape == (N, Cout, H, W)
    err = float(jnp.max(jnp.abs(y - yr)))
    assert jnp.allclose(y, yr, atol=2e-3, rtol=2e-3), err

    # Informational only: deviation vs full-f32 math (bf16 input quantization effect).
    yf = jnp.transpose(x, (0, 2, 3, 1)).reshape(-1, Cin) @ w.T
    mf = yf.mean(axis=0, keepdims=True)
    vf = ((yf - mf) ** 2).mean(axis=0, keepdims=True)
    yf = (yf - mf) / jnp.sqrt(vf + 1e-5) * gamma + beta
    yf = jnp.transpose(yf.reshape(N, H, W, Cout), (0, 3, 1, 2))
    _f32_dev = float(jnp.max(jnp.abs(y - yf)))  # not asserted (quantization noise)

    print("KERNEL_OK")
</pallas_src>

<mosaic_0001>
module attributes {stable_mosaic.version = 11 : i64} {
  func.func @conv_bn_kernel(%arg0: i32, %arg1: memref<49x192xbf16, #tpu.memory_space<vmem>>, %arg2: memref<192x1152xbf16, #tpu.memory_space<vmem>>, %arg3: memref<1x1152xf32, #tpu.memory_space<vmem>>, %arg4: memref<1x1152xf32, #tpu.memory_space<vmem>>, %arg5: memref<49x1152xf32, #tpu.memory_space<vmem>>) attributes {dimension_semantics = [#tpu.dimension_semantics<parallel>], iteration_bounds = array<i64: 1>, scalar_prefetch = 0 : i64, scratch_operands = 0 : i64, tpu.core_type = #tpu.core_type<tc>, window_params = [{pipeline_mode = #tpu.pipeline_mode<synchronous>, transform_indices = @transform_0, window_bounds = array<i64: 49, 192>}, {transform_indices = @transform_1, window_bounds = array<i64: 192, 1152>}, {transform_indices = @transform_2, window_bounds = array<i64: 1, 1152>}, {transform_indices = @transform_3, window_bounds = array<i64: 1, 1152>}, {transform_indices = @transform_4, window_bounds = array<i64: 49, 1152>}]} {
    %c0 = arith.constant 0 : index
    %c0_0 = arith.constant 0 : index
    %0 = vector.load %arg1[%c0, %c0_0] : memref<49x192xbf16, #tpu.memory_space<vmem>>, vector<49x192xbf16>
    %c0_1 = arith.constant 0 : index
    %c0_2 = arith.constant 0 : index
    %1 = vector.load %arg2[%c0_1, %c0_2] : memref<192x1152xbf16, #tpu.memory_space<vmem>>, vector<192x1152xbf16>
    %cst = arith.constant dense<0.000000e+00> : vector<49x1152xf32>
    %2 = tpu.matmul %0, %1, %cst {dimension_numbers = #tpu.dot_dimension_numbers<[1], [0], [0], [1], [0, 0, 1, 1], [], []>} : vector<49x192xbf16>, vector<192x1152xbf16>, vector<49x1152xf32> -> vector<49x1152xf32>
    %c0_3 = arith.constant 0 : index
    %c0_4 = arith.constant 0 : index
    %3 = vector.load %arg5[%c0_3, %c0_4] : memref<49x1152xf32, #tpu.memory_space<vmem>>, vector<49x1152xf32>
    tpu.vector_store %arg5[%c0_3, %c0_4], %2 {strides = array<i32>} : memref<49x1152xf32, #tpu.memory_space<vmem>>, vector<49x1152xf32>,
    %c0_5 = arith.constant 0 : index
    %c0_6 = arith.constant 0 : index
    %4 = vector.load %arg5[%c0_5, %c0_6] : memref<49x1152xf32, #tpu.memory_space<vmem>>, vector<49x1152xf32>
    %cst_7 = arith.constant dense<0.000000e+00> : vector<1152xf32>
    %5 = vector.multi_reduction <add>, %4, %cst_7 [0] : vector<49x1152xf32> to vector<1152xf32>
    %6 = vector.shape_cast %5 : vector<1152xf32> to vector<1x1152xf32>
    %cst_8 = arith.constant 0.0204081628 : f32
    %7 = vector.broadcast %cst_8 : f32 to vector<1x1152xf32>
    %8 = arith.mulf %6, %7 : vector<1x1152xf32>
    %9 = arith.mulf %4, %4 : vector<49x1152xf32>
    %cst_9 = arith.constant dense<0.000000e+00> : vector<1152xf32>
    %10 = vector.multi_reduction <add>, %9, %cst_9 [0] : vector<49x1152xf32> to vector<1152xf32>
    %11 = vector.shape_cast %10 : vector<1152xf32> to vector<1x1152xf32>
    %cst_10 = arith.constant 0.0204081628 : f32
    %12 = vector.broadcast %cst_10 : f32 to vector<1x1152xf32>
    %13 = arith.mulf %11, %12 : vector<1x1152xf32>
    %14 = arith.mulf %8, %8 : vector<1x1152xf32>
    %15 = arith.subf %13, %14 : vector<1x1152xf32>
    %cst_11 = arith.constant 9.99999974E-6 : f32
    %16 = vector.broadcast %cst_11 : f32 to vector<1x1152xf32>
    %17 = arith.addf %15, %16 : vector<1x1152xf32>
    %18 = math.rsqrt %17 : vector<1x1152xf32>
    %c0_12 = arith.constant 0 : index
    %c0_13 = arith.constant 0 : index
    %19 = vector.load %arg3[%c0_12, %c0_13] : memref<1x1152xf32, #tpu.memory_space<vmem>>, vector<1x1152xf32>
    %20 = arith.mulf %19, %18 : vector<1x1152xf32>
    %c0_14 = arith.constant 0 : index
    %c0_15 = arith.constant 0 : index
    %21 = vector.load %arg4[%c0_14, %c0_15] : memref<1x1152xf32, #tpu.memory_space<vmem>>, vector<1x1152xf32>
    %22 = arith.mulf %8, %20 : vector<1x1152xf32>
    %23 = arith.subf %21, %22 : vector<1x1152xf32>
    %24 = vector.broadcast %20 : vector<1x1152xf32> to vector<49x1152xf32>
    %25 = arith.mulf %4, %24 : vector<49x1152xf32>
    %26 = vector.broadcast %23 : vector<1x1152xf32> to vector<49x1152xf32>
    %27 = arith.addf %25, %26 : vector<49x1152xf32>
    %c0_16 = arith.constant 0 : index
    %c0_17 = arith.constant 0 : index
    %28 = vector.load %arg5[%c0_16, %c0_17] : memref<49x1152xf32, #tpu.memory_space<vmem>>, vector<49x1152xf32>
    tpu.vector_store %arg5[%c0_16, %c0_17], %27 {strides = array<i32>} : memref<49x1152xf32, #tpu.memory_space<vmem>>, vector<49x1152xf32>,
    return
  }
  func.func @transform_0(%arg0: i32) -> (i32, i32) {
    %c0_i32 = arith.constant 0 : i32
    %c0_i32_0 = arith.constant 0 : i32
    %c0_i32_1 = arith.constant 0 : i32
    return %c0_i32, %c0_i32_0 : i32, i32
  }
  func.func @transform_1(%arg0: i32) -> (i32, i32) {
    %c0_i32 = arith.constant 0 : i32
    %c0_i32_0 = arith.constant 0 : i32
    return %c0_i32, %arg0 : i32, i32
  }
  func.func @transform_2(%arg0: i32) -> (i32, i32) {
    %c0_i32 = arith.constant 0 : i32
    %c0_i32_0 = arith.constant 0 : i32
    return %c0_i32, %arg0 : i32, i32
  }
  func.func @transform_3(%arg0: i32) -> (i32, i32) {
    %c0_i32 = arith.constant 0 : i32
    %c0_i32_0 = arith.constant 0 : i32
    return %c0_i32, %arg0 : i32, i32
  }
  func.func @transform_4(%arg0: i32) -> (i32, i32) {
    %c0_i32 = arith.constant 0 : i32
    %c0_i32_0 = arith.constant 0 : i32
    return %c0_i32, %arg0 : i32, i32
  }
}

</mosaic_0001>

<llo_original>
// kernel: tpu_custom_call.1
$region0: #{tpu_custom_call.1}
  #allocation0 [shape = 'u32[]', space=smem, size = 0x4, offset = 0x4, fixed_abs, tag = 'smem constant byte address 0x4 - core index']
  #allocation1 [shape = 'u32[144,128]{1,0:T(1,128)}', space=vmem, size = 0x12000, scoped, tag = 'internal scratch']
  %s0 = inlined_call_operand.hbm [shape: bf16[49,192], index: 0, kind: input, shape index: {}]
  %s1 = inlined_call_operand.hbm [shape: bf16[192,1152], index: 1, kind: input, shape index: {}]
  %s2 = inlined_call_operand.hbm [shape: f32[1,1152], index: 2, kind: input, shape index: {}]
  %s3 = inlined_call_operand.vmem [shape: f32[1,1152], index: 3, kind: input, shape index: {}]
  %s4 = inlined_call_operand.hbm [shape: f32[49,1152], index: 4, kind: output, shape index: {}]
  %s5 = sld [smem:[#allocation0]]
  $region38: #{tpu_custom_call.1} parent=0
    _
  %s7 = ssub.s32 1, %s5
  %s8 = scalar_select 0, %s7, %s5
  $region1: #{tpu_custom_call.1} parent=0
    #allocation2 [shape = 'u8[28672]{0}', space=vmem, size = 0x7000, scoped, tag = 'input window, operand 0, single buffered']
    #allocation3 [shape = 's32[1]{0}', space=sflag, size = 0x4, scoped, tag = 'scoped memory for tpu_custom_call.1']
    #allocation4 [shape = 's32[1]{0}', space=sflag, size = 0x4, scoped, tag = 'scoped memory for tpu_custom_call.1']
    #allocation5 [shape = 'u8[442368]{0}', space=vmem, size = 0x6c000, scoped, tag = 'input window, operand 1, single buffered']
    #allocation6 [shape = 's32[1]{0}', space=sflag, size = 0x4, scoped, tag = 'scoped memory for tpu_custom_call.1']
    #allocation7 [shape = 'u8[4608]{0}', space=vmem, size = 0x1400, scoped, tag = 'input window, operand 2, single buffered']
    #allocation8 [shape = 'u8[258048]{0}', space=vmem, size = 0x3f000, scoped, tag = 'output window, operand 0, single buffered']
    %9 = vsyncpa [#allocation3], 0
    %10 = vsyncpa [#allocation6], 0
    %11 = vsyncpa [#allocation4], 0
    // Predicated region
    $region2: #{tpu_custom_call.1} parent=1 // pred_check
      _
    $region3: #{tpu_custom_call.1} parent=1 // pred_check_branch
      %13 = sbr.rel (0) target = $region5
    $region4: #{tpu_custom_call.1} parent=1 // pred_region
      %s15 = ssub.s32 896, 896
      %16 = vsyncadd [#allocation3], %s15
      %s17 = sshll.u32 [#allocation2], 4
      %s18 = int_to_ptr.vmem [resolvable:$true] %s17
      %23 = dma.hbm_to_vmem [thread:$0]  %s0, 896, %s18, [#allocation3], 128, 128, 8
    $region5: #{tpu_custom_call.1} parent=1 // pred_fallthru
      _
    // Predicated region
    $region6: #{tpu_custom_call.1} parent=1 // pred_check
      _
    $region7: #{tpu_custom_call.1} parent=1 // pred_check_branch
      %25 = sbr.rel (0) target = $region9
    $region8: #{tpu_custom_call.1} parent=1 // pred_region
      %s27 = ssub.s32 13824, 13824
      %28 = vsyncadd [#allocation6], %s27
      %s29 = sshll.u32 [#allocation5], 4
      %s30 = int_to_ptr.vmem [resolvable:$true] %s29
      %35 = dma.hbm_to_vmem [thread:$0]  %s1, 13824, %s30, [#allocation6], 576, 576, 36
    $region9: #{tpu_custom_call.1} parent=1 // pred_fallthru
      _
    // Predicated region
    $region10: #{tpu_custom_call.1} parent=1 // pred_check
      _
    $region11: #{tpu_custom_call.1} parent=1 // pred_check_branch
      %37 = sbr.rel (0) target = $region13
    $region12: #{tpu_custom_call.1} parent=1 // pred_region
      %s39 = ssub.s32 144, 144
      %40 = vsyncadd [#allocation6], %s39
      %s42 = sshll.u32 [#allocation7], 4
      %s43 = int_to_ptr.vmem [resolvable:$true] %s42
      %45 = dma.hbm_to_vmem [thread:$0]  %s2, 144, %s43, [#allocation6]
    $region13: #{tpu_custom_call.1} parent=1 // pred_fallthru
      _
    // Predicated region
    $region14: #{tpu_custom_call.1} parent=1 // pred_check
      _
    $region15: #{tpu_custom_call.1} parent=1 // pred_check_branch
      %47 = sbr.rel (0) target = $region17
    $region16: #{tpu_custom_call.1} parent=1 // pred_region
      _
    $region17: #{tpu_custom_call.1} parent=1 // pred_fallthru
      _
    // Predicated region
    $region18: #{tpu_custom_call.1} parent=1 // pred_check
      _
    $region19: #{tpu_custom_call.1} parent=1 // pred_check_branch
      %49 = sbr.rel (0) target = $region21
    $region20: #{tpu_custom_call.1} parent=1 // pred_region
      %50 = dma.done [#allocation3], 896
    $region21: #{tpu_custom_call.1} parent=1 // pred_fallthru
      _
    // Predicated region
    $region22: #{tpu_custom_call.1} parent=1 // pred_check
      _
    $region23: #{tpu_custom_call.1} parent=1 // pred_check_branch
      %52 = sbr.rel (0) target = $region25
    $region24: #{tpu_custom_call.1} parent=1 // pred_region
      %53 = dma.done [#allocation6], 13824
    $region25: #{tpu_custom_call.1} parent=1 // pred_fallthru
      _
    // Predicated region
    $region26: #{tpu_custom_call.1} parent=1 // pred_check
      _
    $region27: #{tpu_custom_call.1} parent=1 // pred_check_branch
      %55 = sbr.rel (0) target = $region29
    $region28: #{tpu_custom_call.1} parent=1 // pred_region
      %56 = dma.done [#allocation6], 144
    $region29: #{tpu_custom_call.1} parent=1 // pred_fallthru
      _
    %v58 = vld [vmem:[#allocation2] sm:$0xff]
    %v59 = vld [vmem:[#allocation2 + $0x8] sm:$0xff]
    %v60 = vld [vmem:[#allocation2 + $0x10] sm:$0xff]
    %v61 = vld [vmem:[#allocation2 + $0x18] sm:$0xff]
    %v62 = vld [vmem:[#allocation2 + $0x20] sm:$0xff]
    %v63 = vld [vmem:[#allocation2 + $0x28] sm:$0xff]
    %v64 = vld [vmem:[#allocation2 + $0x30] sm:$0x11]
    %v65 = vld [vmem:[#allocation5] sm:$0xff]
    %v66 = vld [vmem:[#allocation5 + $0x8] sm:$0xff]
    %v67 = vld [vmem:[#allocation5 + $0x10] sm:$0xff]
    %v68 = vld [vmem:[#allocation5 + $0x18] sm:$0xff]
    %v69 = vld [vmem:[#allocation5 + $0x20] sm:$0xf]
    %v70 = vld [vmem:[#allocation5 + $0x24] sm:$0xff]
    %v71 = vld [vmem:[#allocation5 + $0x2c] sm:$0xff]
    %v72 = vld [vmem:[#allocation5 + $0x34] sm:$0xff]
    %v73 = vld [vmem:[#allocation5 + $0x3c] sm:$0xff]
    %v74 = vld [vmem:[#allocation5 + $0x44] sm:$0xf]
    %v75 = vld [vmem:[#allocation5 + $0x48] sm:$0xff]
    %v76 = vld [vmem:[#allocation5 + $0x50] sm:$0xff]
    %v77 = vld [vmem:[#allocation5 + $0x58] sm:$0xff]
    %v78 = vld [vmem:[#allocation5 + $0x60] sm:$0xff]
    %v79 = vld [vmem:[#allocation5 + $0x68] sm:$0xf]
    %v80 = vld [vmem:[#allocation5 + $0x6c] sm:$0xff]
    %v81 = vld [vmem:[#allocation5 + $0x74] sm:$0xff]
    %v82 = vld [vmem:[#allocation5 + $0x7c] sm:$0xff]
    %v83 = vld [vmem:[#allocation5 + $0x84] sm:$0xff]
    %v84 = vld [vmem:[#allocation5 + $0x8c] sm:$0xf]
    %v85 = vld [vmem:[#allocation5 + $0x90] sm:$0xff]
    %v86 = vld [vmem:[#allocation5 + $0x98] sm:$0xff]
    %v87 = vld [vmem:[#allocation5 + $0xa0] sm:$0xff]
    %v88 = vld [vmem:[#allocation5 + $0xa8] sm:$0xff]
    %v89 = vld [vmem:[#allocation5 + $0xb0] sm:$0xf]
    %v90 = vld [vmem:[#allocation5 + $0xb4] sm:$0xff]
    %v91 = vld [vmem:[#allocation5 + $0xbc] sm:$0xff]
    %v92 = vld [vmem:[#allocation5 + $0xc4] sm:$0xff]
    %v93 = vld [vmem:[#allocation5 + $0xcc] sm:$0xff]
    %v94 = vld [vmem:[#allocation5 + $0xd4] sm:$0xf]
    %v95 = vld [vmem:[#allocation5 + $0xd8] sm:$0xff]
    %v96 = vld [vmem:[#allocation5 + $0xe0] sm:$0xff]
    %v97 = vld [vmem:[#allocation5 + $0xe8] sm:$0xff]
    %v98 = vld [vmem:[#allocation5 + $0xf0] sm:$0xff]
    %v99 = vld [vmem:[#allocation5 + $0xf8] sm:$0xf]
    %v100 = vld [vmem:[#allocation5 + $0xfc] sm:$0xff]
    %v101 = vld [vmem:[#allocation5 + $0x104] sm:$0xff]
    %v102 = vld [vmem:[#allocation5 + $0x10c] sm:$0xff]
    %v103 = vld [vmem:[#allocation5 + $0x114] sm:$0xff]
    %v104 = vld [vmem:[#allocation5 + $0x11c] sm:$0xf]
    %v105 = vld [vmem:[#allocation5 + $0x120] sm:$0xff]
    %v106 = vld [vmem:[#allocation5 + $0x128] sm:$0xff]
    %v107 = vld [vmem:[#allocation5 + $0x130] sm:$0xff]
    %v108 = vld [vmem:[#allocation5 + $0x138] sm:$0xff]
    %v109 = vld [vmem:[#allocation5 + $0x140] sm:$0xf]
    %v110 = vld [vmem:[#allocation5 + $0x144] sm:$0xff]
    %v111 = vld [vmem:[#allocation5 + $0x14c] sm:$0xff]
    %v112 = vld [vmem:[#allocation5 + $0x154] sm:$0xff]
    %v113 = vld [vmem:[#allocation5 + $0x15c] sm:$0xff]
    %v114 = vld [vmem:[#allocation5 + $0x164] sm:$0xf]
    %v115 = vld [vmem:[#allocation5 + $0x168] sm:$0xff]
    %v116 = vld [vmem:[#allocation5 + $0x170] sm:$0xff]
    %v117 = vld [vmem:[#allocation5 + $0x178] sm:$0xff]
    %v118 = vld [vmem:[#allocation5 + $0x180] sm:$0xff]
    %v119 = vld [vmem:[#allocation5 + $0x188] sm:$0xf]
    %v120 = vld [vmem:[#allocation5 + $0x18c] sm:$0xff]
    %v121 = vld [vmem:[#allocation5 + $0x194] sm:$0xff]
    %v122 = vld [vmem:[#allocation5 + $0x19c] sm:$0xff]
    %v123 = vld [vmem:[#allocation5 + $0x1a4] sm:$0xff]
    %v124 = vld [vmem:[#allocation5 + $0x1ac] sm:$0xf]
    %v125 = vld [vmem:[#allocation5 + $0x1b0] sm:$0xff]
    %v126 = vld [vmem:[#allocation5 + $0x1b8] sm:$0xff]
    %v127 = vld [vmem:[#allocation5 + $0x1c0] sm:$0xff]
    %v128 = vld [vmem:[#allocation5 + $0x1c8] sm:$0xff]
    %v129 = vld [vmem:[#allocation5 + $0x1d0] sm:$0xf]
    %v130 = vld [vmem:[#allocation5 + $0x1d4] sm:$0xff]
    %v131 = vld [vmem:[#allocation5 + $0x1dc] sm:$0xff]
    %v132 = vld [vmem:[#allocation5 + $0x1e4] sm:$0xff]
    %v133 = vld [vmem:[#allocation5 + $0x1ec] sm:$0xff]
    %v134 = vld [vmem:[#allocation5 + $0x1f4] sm:$0xf]
    %v135 = vld [vmem:[#allocation5 + $0x1f8] sm:$0xff]
    %v136 = vld [vmem:[#allocation5 + $0x200] sm:$0xff]
    %v137 = vld [vmem:[#allocation5 + $0x208] sm:$0xff]
    %v138 = vld [vmem:[#allocation5 + $0x210] sm:$0xff]
    %v139 = vld [vmem:[#allocation5 + $0x218] sm:$0xf]
    %v140 = vld [vmem:[#allocation5 + $0x21c] sm:$0xff]
    %v141 = vld [vmem:[#allocation5 + $0x224] sm:$0xff]
    %v142 = vld [vmem:[#allocation5 + $0x22c] sm:$0xff]
    %v143 = vld [vmem:[#allocation5 + $0x234] sm:$0xff]
    %v144 = vld [vmem:[#allocation5 + $0x23c] sm:$0xf]
    %v145 = vld [vmem:[#allocation5 + $0x240] sm:$0xff]
    %v146 = vld [vmem:[#allocation5 + $0x248] sm:$0xff]
    %v147 = vld [vmem:[#allocation5 + $0x250] sm:$0xff]
    %v148 = vld [vmem:[#allocation5 + $0x258] sm:$0xff]
    %v149 = vld [vmem:[#allocation5 + $0x260] sm:$0xf]
    %v150 = vld [vmem:[#allocation5 + $0x264] sm:$0xff]
    %v151 = vld [vmem:[#allocation5 + $0x26c] sm:$0xff]
    %v152 = vld [vmem:[#allocation5 + $0x274] sm:$0xff]
    %v153 = vld [vmem:[#allocation5 + $0x27c] sm:$0xff]
    %v154 = vld [vmem:[#allocation5 + $0x284] sm:$0xf]
    %v155 = vld [vmem:[#allocation5 + $0x288] sm:$0xff]
    %v156 = vld [vmem:[#allocation5 + $0x290] sm:$0xff]
    %v157 = vld [vmem:[#allocation5 + $0x298] sm:$0xff]
    %v158 = vld [vmem:[#allocation5 + $0x2a0] sm:$0xff]
    %v159 = vld [vmem:[#allocation5 + $0x2a8] sm:$0xf]
    %v160 = vld [vmem:[#allocation5 + $0x2ac] sm:$0xff]
    %v161 = vld [vmem:[#allocation5 + $0x2b4] sm:$0xff]
    %v162 = vld [vmem:[#allocation5 + $0x2bc] sm:$0xff]
    %v163 = vld [vmem:[#allocation5 + $0x2c4] sm:$0xff]
    %v164 = vld [vmem:[#allocation5 + $0x2cc] sm:$0xf]
    %v165 = vld [vmem:[#allocation5 + $0x2d0] sm:$0xff]
    %v166 = vld [vmem:[#allocation5 + $0x2d8] sm:$0xff]
    %v167 = vld [vmem:[#allocation5 + $0x2e0] sm:$0xff]
    %v168 = vld [vmem:[#allocation5 + $0x2e8] sm:$0xff]
    %v169 = vld [vmem:[#allocation5 + $0x2f0] sm:$0xf]
    %v170 = vld [vmem:[#allocation5 + $0x2f4] sm:$0xff]
    %v171 = vld [vmem:[#allocation5 + $0x2fc] sm:$0xff]
    %v172 = vld [vmem:[#allocation5 + $0x304] sm:$0xff]
    %v173 = vld [vmem:[#allocation5 + $0x30c] sm:$0xff]
    %v174 = vld [vmem:[#allocation5 + $0x314] sm:$0xf]
    %v175 = vld [vmem:[#allocation5 + $0x318] sm:$0xff]
    %v176 = vld [vmem:[#allocation5 + $0x320] sm:$0xff]
    %v177 = vld [vmem:[#allocation5 + $0x328] sm:$0xff]
    %v178 = vld [vmem:[#allocation5 + $0x330] sm:$0xff]
    %v179 = vld [vmem:[#allocation5 + $0x338] sm:$0xf]
    %v180 = vld [vmem:[#allocation5 + $0x33c] sm:$0xff]
    %v181 = vld [vmem:[#allocation5 + $0x344] sm:$0xff]
    %v182 = vld [vmem:[#allocation5 + $0x34c] sm:$0xff]
    %v183 = vld [vmem:[#allocation5 + $0x354] sm:$0xff]
    %v184 = vld [vmem:[#allocation5 + $0x35c] sm:$0xf]
    %v192 = vunpack.c.l.b16 %v58
    %v193 = vunpack.c.h.b16 %v58
    %v194 = vunpack.c.l.b16 %v59
    %v195 = vunpack.c.h.b16 %v59
    %v196 = vunpack.c.l.b16 %v60
    %v197 = vunpack.c.h.b16 %v60
    %v198 = vunpack.c.l.b16 %v61
    %v199 = vunpack.c.h.b16 %v61
    %v200 = vunpack.c.l.b16 %v62
    %v201 = vunpack.c.h.b16 %v62
    %v202 = vunpack.c.l.b16 %v63
    %v203 = vunpack.c.h.b16 %v63
    %v204 = vunpack.c.l.b16 %v64
    %v205 = vunpack.c.h.b16 %v64
    %v206 = vpack.c.b16 %v194, %v192
    %v207 = vpack.c.b16 %v195, %v193
    %v208 = vpack.c.b16 %v198, %v196
    %v209 = vpack.c.b16 %v199, %v197
    %v210 = vpack.c.b16 %v202, %v200
    %v211 = vpack.c.b16 %v203, %v201
    %v212 = vpack.c.b16 %v204, %v204
    %v213 = vpack.c.b16 %v205, %v205
    %v338 = vunpack.c.l.b16 %v65
    %v339 = vunpack.c.h.b16 %v65
    %v340 = vunpack.c.l.b16 %v66
    %v341 = vunpack.c.h.b16 %v66
    %v342 = vunpack.c.l.b16 %v67
    %v343 = vunpack.c.h.b16 %v67
    %v344 = vunpack.c.l.b16 %v68
    %v345 = vunpack.c.h.b16 %v68
    %v346 = vunpack.c.l.b16 %v69
    %v347 = vunpack.c.l.b16 %v70
    %v348 = vunpack.c.h.b16 %v70
    %v349 = vunpack.c.l.b16 %v71
    %v350 = vunpack.c.h.b16 %v71
    %v351 = vunpack.c.l.b16 %v72
    %v352 = vunpack.c.h.b16 %v72
    %v353 = vunpack.c.l.b16 %v73
    %v354 = vunpack.c.h.b16 %v73
    %v355 = vunpack.c.l.b16 %v74
    %v356 = vunpack.c.l.b16 %v75
    %v357 = vunpack.c.h.b16 %v75
    %v358 = vunpack.c.l.b16 %v76
    %v359 = vunpack.c.h.b16 %v76
    %v360 = vunpack.c.l.b16 %v77
    %v361 = vunpack.c.h.b16 %v77
    %v362 = vunpack.c.l.b16 %v78
    %v363 = vunpack.c.h.b16 %v78
    %v364 = vunpack.c.l.b16 %v79
    %v365 = vunpack.c.l.b16 %v80
    %v366 = vunpack.c.h.b16 %v80
    %v367 = vunpack.c.l.b16 %v81
    %v368 = vunpack.c.h.b16 %v81
    %v369 = vunpack.c.l.b16 %v82
    %v370 = vunpack.c.h.b16 %v82
    %v371 = vunpack.c.l.b16 %v83
    %v372 = vunpack.c.h.b16 %v83
    %v373 = vunpack.c.l.b16 %v84
    %v374 = vunpack.c.l.b16 %v85
    %v375 = vunpack.c.h.b16 %v85
    %v376 = vunpack.c.l.b16 %v86
    %v377 = vunpack.c.h.b16 %v86
    %v378 = vunpack.c.l.b16 %v87
    %v379 = vunpack.c.h.b16 %v87
    %v380 = vunpack.c.l.b16 %v88
    %v381 = vunpack.c.h.b16 %v88
    %v382 = vunpack.c.l.b16 %v89
    %v383 = vunpack.c.l.b16 %v90
    %v384 = vunpack.c.h.b16 %v90
    %v385 = vunpack.c.l.b16 %v91
    %v386 = vunpack.c.h.b16 %v91
    %v387 = vunpack.c.l.b16 %v92
    %v388 = vunpack.c.h.b16 %v92
    %v389 = vunpack.c.l.b16 %v93
    %v390 = vunpack.c.h.b16 %v93
    %v391 = vunpack.c.l.b16 %v94
    %v392 = vunpack.c.l.b16 %v95
    %v393 = vunpack.c.h.b16 %v95
    %v394 = vunpack.c.l.b16 %v96
    %v395 = vunpack.c.h.b16 %v96
    %v396 = vunpack.c.l.b16 %v97
    %v397 = vunpack.c.h.b16 %v97
    %v398 = vunpack.c.l.b16 %v98
    %v399 = vunpack.c.h.b16 %v98
    %v400 = vunpack.c.l.b16 %v99
    %v401 = vunpack.c.l.b16 %v100
    %v402 = vunpack.c.h.b16 %v100
    %v403 = vunpack.c.l.b16 %v101
    %v404 = vunpack.c.h.b16 %v101
    %v405 = vunpack.c.l.b16 %v102
    %v406 = vunpack.c.h.b16 %v102
    %v407 = vunpack.c.l.b16 %v103
    %v408 = vunpack.c.h.b16 %v103
    %v409 = vunpack.c.l.b16 %v104
    %v410 = vunpack.c.l.b16 %v105
    %v411 = vunpack.c.h.b16 %v105
    %v412 = vunpack.c.l.b16 %v106
    %v413 = vunpack.c.h.b16 %v106
    %v414 = vunpack.c.l.b16 %v107
    %v415 = vunpack.c.h.b16 %v107
    %v416 = vunpack.c.l.b16 %v108
    %v417 = vunpack.c.h.b16 %v108
    %v418 = vunpack.c.l.b16 %v109
    %v419 = vunpack.c.l.b16 %v110
    %v420 = vunpack.c.h.b16 %v110
    %v421 = vunpack.c.l.b16 %v111
    %v422 = vunpack.c.h.b16 %v111
    %v423 = vunpack.c.l.b16 %v112
    %v424 = vunpack.c.h.b16 %v112
    %v425 = vunpack.c.l.b16 %v113
    %v426 = vunpack.c.h.b16 %v113
    %v427 = vunpack.c.l.b16 %v114
    %v428 = vunpack.c.l.b16 %v115
    %v429 = vunpack.c.h.b16 %v115
    %v430 = vunpack.c.l.b16 %v116
    %v431 = vunpack.c.h.b16 %v116
    %v432 = vunpack.c.l.b16 %v117
    %v433 = vunpack.c.h.b16 %v117
    %v434 = vunpack.c.l.b16 %v118
    %v435 = vunpack.c.h.b16 %v118
    %v436 = vunpack.c.l.b16 %v119
    %v437 = vunpack.c.l.b16 %v120
    %v438 = vunpack.c.h.b16 %v120
    %v439 = vunpack.c.l.b16 %v121
    %v440 = vunpack.c.h.b16 %v121
    %v441 = vunpack.c.l.b16 %v122
    %v442 = vunpack.c.h.b16 %v122
    %v443 = vunpack.c.l.b16 %v123
    %v444 = vunpack.c.h.b16 %v123
    %v445 = vunpack.c.l.b16 %v124
    %v446 = vunpack.c.l.b16 %v125
    %v447 = vunpack.c.h.b16 %v125
    %v448 = vunpack.c.l.b16 %v126
    %v449 = vunpack.c.h.b16 %v126
    %v450 = vunpack.c.l.b16 %v127
    %v451 = vunpack.c.h.b16 %v127
    %v452 = vunpack.c.l.b16 %v128
    %v453 = vunpack.c.h.b16 %v128
    %v454 = vunpack.c.l.b16 %v129
    %v455 = vunpack.c.l.b16 %v130
    %v456 = vunpack.c.h.b16 %v130
    %v457 = vunpack.c.l.b16 %v131
    %v458 = vunpack.c.h.b16 %v131
    %v459 = vunpack.c.l.b16 %v132
    %v460 = vunpack.c.h.b16 %v132
    %v461 = vunpack.c.l.b16 %v133
    %v462 = vunpack.c.h.b16 %v133
    %v463 = vunpack.c.l.b16 %v134
    %v464 = vunpack.c.l.b16 %v135
    %v465 = vunpack.c.h.b16 %v135
    %v466 = vunpack.c.l.b16 %v136
    %v467 = vunpack.c.h.b16 %v136
    %v468 = vunpack.c.l.b16 %v137
    %v469 = vunpack.c.h.b16 %v137
    %v470 = vunpack.c.l.b16 %v138
    %v471 = vunpack.c.h.b16 %v138
    %v472 = vunpack.c.l.b16 %v139
    %v473 = vunpack.c.l.b16 %v140
    %v474 = vunpack.c.h.b16 %v140
    %v475 = vunpack.c.l.b16 %v141
    %v476 = vunpack.c.h.b16 %v141
    %v477 = vunpack.c.l.b16 %v142
    %v478 = vunpack.c.h.b16 %v142
    %v479 = vunpack.c.l.b16 %v143
    %v480 = vunpack.c.h.b16 %v143
    %v481 = vunpack.c.l.b16 %v144
    %v482 = vunpack.c.l.b16 %v145
    %v483 = vunpack.c.h.b16 %v145
    %v484 = vunpack.c.l.b16 %v146
    %v485 = vunpack.c.h.b16 %v146
    %v486 = vunpack.c.l.b16 %v147
    %v487 = vunpack.c.h.b16 %v147
    %v488 = vunpack.c.l.b16 %v148
    %v489 = vunpack.c.h.b16 %v148
    %v490 = vunpack.c.l.b16 %v149
    %v491 = vunpack.c.l.b16 %v150
    %v492 = vunpack.c.h.b16 %v150
    %v493 = vunpack.c.l.b16 %v151
    %v494 = vunpack.c.h.b16 %v151
    %v495 = vunpack.c.l.b16 %v152
    %v496 = vunpack.c.h.b16 %v152
    %v497 = vunpack.c.l.b16 %v153
    %v498 = vunpack.c.h.b16 %v153
    %v499 = vunpack.c.l.b16 %v154
    %v500 = vunpack.c.l.b16 %v155
    %v501 = vunpack.c.h.b16 %v155
    %v502 = vunpack.c.l.b16 %v156
    %v503 = vunpack.c.h.b16 %v156
    %v504 = vunpack.c.l.b16 %v157
    %v505 = vunpack.c.h.b16 %v157
    %v506 = vunpack.c.l.b16 %v158
    %v507 = vunpack.c.h.b16 %v158
    %v508 = vunpack.c.l.b16 %v159
    %v509 = vunpack.c.l.b16 %v160
    %v510 = vunpack.c.h.b16 %v160
    %v511 = vunpack.c.l.b16 %v161
    %v512 = vunpack.c.h.b16 %v161
    %v513 = vunpack.c.l.b16 %v162
    %v514 = vunpack.c.h.b16 %v162
    %v515 = vunpack.c.l.b16 %v163
    %v516 = vunpack.c.h.b16 %v163
    %v517 = vunpack.c.l.b16 %v164
    %v518 = vunpack.c.l.b16 %v165
    %v519 = vunpack.c.h.b16 %v165
    %v520 = vunpack.c.l.b16 %v166
    %v521 = vunpack.c.h.b16 %v166
    %v522 = vunpack.c.l.b16 %v167
    %v523 = vunpack.c.h.b16 %v167
    %v524 = vunpack.c.l.b16 %v168
    %v525 = vunpack.c.h.b16 %v168
    %v526 = vunpack.c.l.b16 %v169
    %v527 = vunpack.c.l.b16 %v170
    %v528 = vunpack.c.h.b16 %v170
    %v529 = vunpack.c.l.b16 %v171
    %v530 = vunpack.c.h.b16 %v171
    %v531 = vunpack.c.l.b16 %v172
    %v532 = vunpack.c.h.b16 %v172
    %v533 = vunpack.c.l.b16 %v173
    %v534 = vunpack.c.h.b16 %v173
    %v535 = vunpack.c.l.b16 %v174
    %v536 = vunpack.c.l.b16 %v175
    %v537 = vunpack.c.h.b16 %v175
    %v538 = vunpack.c.l.b16 %v176
    %v539 = vunpack.c.h.b16 %v176
    %v540 = vunpack.c.l.b16 %v177
    %v541 = vunpack.c.h.b16 %v177
    %v542 = vunpack.c.l.b16 %v178
    %v543 = vunpack.c.h.b16 %v178
    %v544 = vunpack.c.l.b16 %v179
    %v545 = vunpack.c.l.b16 %v180
    %v546 = vunpack.c.h.b16 %v180
    %v547 = vunpack.c.l.b16 %v181
    %v548 = vunpack.c.h.b16 %v181
    %v549 = vunpack.c.l.b16 %v182
    %v550 = vunpack.c.h.b16 %v182
    %v551 = vunpack.c.l.b16 %v183
    %v552 = vunpack.c.h.b16 %v183
    %v553 = vunpack.c.l.b16 %v184
    %v554 = vpack.c.b16 %v347, %v338
    %v555 = vpack.c.b16 %v348, %v339
    %v556 = vpack.c.b16 %v349, %v340
    %v557 = vpack.c.b16 %v350, %v341
    %v558 = vpack.c.b16 %v351, %v342
    %v559 = vpack.c.b16 %v352, %v343
    %v560 = vpack.c.b16 %v353, %v344
    %v561 = vpack.c.b16 %v354, %v345
    %v562 = vpack.c.b16 %v355, %v346
    %v563 = vpack.c.b16 %v365, %v356
    %v564 = vpack.c.b16 %v366, %v357
    %v565 = vpack.c.b16 %v367, %v358
    %v566 = vpack.c.b16 %v368, %v359
    %v567 = vpack.c.b16 %v369, %v360
    %v568 = vpack.c.b16 %v370, %v361
    %v569 = vpack.c.b16 %v371, %v362
    %v570 = vpack.c.b16 %v372, %v363
    %v571 = vpack.c.b16 %v373, %v364
    %v572 = vpack.c.b16 %v383, %v374
    %v573 = vpack.c.b16 %v384, %v375
    %v574 = vpack.c.b16 %v385, %v376
    %v575 = vpack.c.b16 %v386, %v377
    %v576 = vpack.c.b16 %v387, %v378
    %v577 = vpack.c.b16 %v388, %v379
    %v578 = vpack.c.b16 %v389, %v380
    %v579 = vpack.c.b16 %v390, %v381
    %v580 = vpack.c.b16 %v391, %v382
    %v581 = vpack.c.b16 %v401, %v392
    %v582 = vpack.c.b16 %v402, %v393
    %v583 = vpack.c.b16 %v403, %v394
    %v584 = vpack.c.b16 %v404, %v395
    %v585 = vpack.c.b16 %v405, %v396
    %v586 = vpack.c.b16 %v406, %v397
    %v587 = vpack.c.b16 %v407, %v398
    %v588 = vpack.c.b16 %v408, %v399
    %v589 = vpack.c.b16 %v409, %v400
    %v590 = vpack.c.b16 %v419, %v410
    %v591 = vpack.c.b16 %v420, %v411
    %v592 = vpack.c.b16 %v421, %v412
    %v593 = vpack.c.b16 %v422, %v413
    %v594 = vpack.c.b16 %v423, %v414
    %v595 = vpack.c.b16 %v424, %v415
    %v596 = vpack.c.b16 %v425, %v416
    %v597 = vpack.c.b16 %v426, %v417
    %v598 = vpack.c.b16 %v427, %v418
    %v599 = vpack.c.b16 %v437, %v428
    %v600 = vpack.c.b16 %v438, %v429
    %v601 = vpack.c.b16 %v439, %v430
    %v602 = vpack.c.b16 %v440, %v431
    %v603 = vpack.c.b16 %v441, %v432
    %v604 = vpack.c.b16 %v442, %v433
    %v605 = vpack.c.b16 %v443, %v434
    %v606 = vpack.c.b16 %v444, %v435
    %v607 = vpack.c.b16 %v445, %v436
    %v608 = vpack.c.b16 %v455, %v446
    %v609 = vpack.c.b16 %v456, %v447
    %v610 = vpack.c.b16 %v457, %v448
    %v611 = vpack.c.b16 %v458, %v449
    %v612 = vpack.c.b16 %v459, %v450
    %v613 = vpack.c.b16 %v460, %v451
    %v614 = vpack.c.b16 %v461, %v452
    %v615 = vpack.c.b16 %v462, %v453
    %v616 = vpack.c.b16 %v463, %v454
    %v617 = vpack.c.b16 %v473, %v464
    %v618 = vpack.c.b16 %v474, %v465
    %v619 = vpack.c.b16 %v475, %v466
    %v620 = vpack.c.b16 %v476, %v467
    %v621 = vpack.c.b16 %v477, %v468
    %v622 = vpack.c.b16 %v478, %v469
    %v623 = vpack.c.b16 %v479, %v470
    %v624 = vpack.c.b16 %v480, %v471
    %v625 = vpack.c.b16 %v481, %v472
    %v626 = vpack.c.b16 %v491, %v482
    %v627 = vpack.c.b16 %v492, %v483
    %v628 = vpack.c.b16 %v493, %v484
    %v629 = vpack.c.b16 %v494, %v485
    %v630 = vpack.c.b16 %v495, %v486
    %v631 = vpack.c.b16 %v496, %v487
    %v632 = vpack.c.b16 %v497, %v488
    %v633 = vpack.c.b16 %v498, %v489
    %v634 = vpack.c.b16 %v499, %v490
    %v635 = vpack.c.b16 %v509, %v500
    %v636 = vpack.c.b16 %v510, %v501
    %v637 = vpack.c.b16 %v511, %v502
    %v638 = vpack.c.b16 %v512, %v503
    %v639 = vpack.c.b16 %v513, %v504
    %v640 = vpack.c.b16 %v514, %v505
    %v641 = vpack.c.b16 %v515, %v506
    %v642 = vpack.c.b16 %v516, %v507
    %v643 = vpack.c.b16 %v517, %v508
    %v644 = vpack.c.b16 %v527, %v518
    %v645 = vpack.c.b16 %v528, %v519
    %v646 = vpack.c.b16 %v529, %v520
    %v647 = vpack.c.b16 %v530, %v521
    %v648 = vpack.c.b16 %v531, %v522
    %v649 = vpack.c.b16 %v532, %v523
    %v650 = vpack.c.b16 %v533, %v524
    %v651 = vpack.c.b16 %v534, %v525
    %v652 = vpack.c.b16 %v535, %v526
    %v653 = vpack.c.b16 %v545, %v536
    %v654 = vpack.c.b16 %v546, %v537
    %v655 = vpack.c.b16 %v547, %v538
    %v656 = vpack.c.b16 %v548, %v539
    %v657 = vpack.c.b16 %v549, %v540
    %v658 = vpack.c.b16 %v550, %v541
    %v659 = vpack.c.b16 %v551, %v542
    %v660 = vpack.c.b16 %v552, %v543
    %v661 = vpack.c.b16 %v553, %v544
    %vm770 = vcmask 523264
    %v772 = vsel %vm770, %v207, 0
    %v775 = vsel %vm770, %v209, 0
    %v778 = vsel %vm770, %v211, 0
    %v781 = vsel %vm770, %v213, 0
    %783 = vmatprep.subr.bf16.mxu0 %v555
    %784 = vmatpush1.bf16.msra.mxu0 %v554
    %785 = vmatprep.subr.bf16.mxu0 %v564
    %786 = vmatpush1.bf16.msra.mxu0 %v563
    %787 = vmatprep.subr.bf16.mxu0 %v573
    %788 = vmatpush1.bf16.msra.mxu0 %v572
    %789 = vmatprep.subr.bf16.mxu0 %v582
    %790 = vmatpush1.bf16.msra.mxu0 %v581
    %791 = vmatprep.subr.bf16.mxu0 %v591
    %792 = vmatpush1.bf16.msra.mxu0 %v590
    %793 = vmatprep.subr.bf16.mxu0 %v600
    %794 = vmatpush1.bf16.msra.mxu0 %v599
    %795 = vmatprep.subr.bf16.mxu0 %v609
    %796 = vmatpush1.bf16.msra.mxu0 %v608
    %797 = vmatprep.subr.bf16.mxu0 %v618
    %798 = vmatpush1.bf16.msra.mxu0 %v617
    %799 = vmatprep.subr.bf16.mxu0 %v627
    %800 = vmatpush1.bf16.msra.mxu0 %v626
    %801 = vmatprep.subr.bf16.mxu0 %v636
    %802 = vmatpush1.bf16.msra.mxu0 %v635
    %803 = vmatprep.subr.bf16.mxu0 %v645
    %804 = vmatpush1.bf16.msra.mxu0 %v644
    %805 = vmatprep.subr.bf16.mxu0 %v654
    %806 = vmatpush1.bf16.msra.mxu0 %v653
    %807 = vmatprep.subr.bf16.mxu0 0
    %808 = vmatpush1.bf16.msra.mxu0 0
    %809 = vmatprep.subr.bf16.mxu0 0
    %810 = vmatpush1.bf16.msra.mxu0 0
    %811 = vmatprep.subr.bf16.mxu0 0
    %812 = vmatpush1.bf16.msra.mxu0 0
    %813 = vmatprep.subr.bf16.mxu0 0
    %814 = vmatpush1.bf16.msra.mxu0 0
    %815 = vmatprep.mubr.bf16.mxu0 %v772
    %816 = vmatmul.mubr.bf16.gmra.mrb[0].mxu0 %v206
    %v817 = vpop.f32.mrb[0].mxu0
    %v818 = vadd.f32 0.0, %v817
    %v819 = vpop.f32.mrb[0].mxu0
    %v820 = vadd.f32 0.0, %v819
    %v821 = vpop.f32.mrb[0].mxu0
    %v822 = vadd.f32 0.0, %v821
    %v823 = vpop.f32.mrb[0].mxu0
    %v824 = vadd.f32 0.0, %v823
    %825 = vmatprep.mubr.bf16.mxu0 %v775
    %826 = vmatmul.mubr.bf16.gmra.mrb[0].mxu0 %v208
    %v827 = vpop.f32.mrb[0].mxu0
    %v828 = vadd.f32 0.0, %v827
    %v829 = vpop.f32.mrb[0].mxu0
    %v830 = vadd.f32 0.0, %v829
    %v831 = vpop.f32.mrb[0].mxu0
    %v832 = vadd.f32 0.0, %v831
    %v833 = vpop.f32.mrb[0].mxu0
    %v834 = vadd.f32 0.0, %v833
    %835 = vmatprep.mubr.bf16.mxu0 %v778
    %836 = vmatmul.mubr.bf16.gmra.mrb[0].mxu0 %v210
    %v837 = vpop.f32.mrb[0].mxu0
    %v838 = vadd.f32 0.0, %v837
    %v839 = vpop.f32.mrb[0].mxu0
    %v840 = vadd.f32 0.0, %v839
    %v841 = vpop.f32.mrb[0].mxu0
    %v842 = vadd.f32 0.0, %v841
    %v843 = vpop.f32.mrb[0].mxu0
    %v844 = vadd.f32 0.0, %v843
    %845 = vmatprep.mubr.bf16.mxu0 %v781
    %846 = vmatmul.mubr.bf16.gmra.mrb[0].mxu0 %v212
    %v847 = vpop.f32.mrb[0].mxu0
    %v848 = vadd.f32 0.0, %v847
    %v849 = vpop.f32.mrb[0].mxu0
    %v850 = vadd.f32 0.0, %v849
    %v851 = vpop.f32.mrb[0].mxu0
    %v852 = vpop.f32.mrb[0].mxu0
    %853 = vdwg.mxu0
    %854 = vmatprep.subr.bf16.mxu0 %v557
    %855 = vmatpush1.bf16.msra.mxu0 %v556
    %856 = vmatprep.subr.bf16.mxu0 %v566
    %857 = vmatpush1.bf16.msra.mxu0 %v565
    %858 = vmatprep.subr.bf16.mxu0 %v575
    %859 = vmatpush1.bf16.msra.mxu0 %v574
    %860 = vmatprep.subr.bf16.mxu0 %v584
    %861 = vmatpush1.bf16.msra.mxu0 %v583
    %862 = vmatprep.subr.bf16.mxu0 %v593
    %863 = vmatpush1.bf16.msra.mxu0 %v592
    %864 = vmatprep.subr.bf16.mxu0 %v602
    %865 = vmatpush1.bf16.msra.mxu0 %v601
    %866 = vmatprep.subr.bf16.mxu0 %v611
    %867 = vmatpush1.bf16.msra.mxu0 %v610
    %868 = vmatprep.subr.bf16.mxu0 %v620
    %869 = vmatpush1.bf16.msra.mxu0 %v619
    %870 = vmatprep.subr.bf16.mxu0 %v629
    %871 = vmatpush1.bf16.msra.mxu0 %v628
    %872 = vmatprep.subr.bf16.mxu0 %v638
    %873 = vmatpush1.bf16.msra.mxu0 %v637
    %874 = vmatprep.subr.bf16.mxu0 %v647
    %875 = vmatpush1.bf16.msra.mxu0 %v646
    %876 = vmatprep.subr.bf16.mxu0 %v656
    %877 = vmatpush1.bf16.msra.mxu0 %v655
    %878 = vmatprep.subr.bf16.mxu0 0
    %879 = vmatpush1.bf16.msra.mxu0 0
    %880 = vmatprep.subr.bf16.mxu0 0
    %881 = vmatpush1.bf16.msra.mxu0 0
    %882 = vmatprep.subr.bf16.mxu0 0
    %883 = vmatpush1.bf16.msra.mxu0 0
    %884 = vmatprep.subr.bf16.mxu0 0
    %885 = vmatpush1.bf16.msra.mxu0 0
    %886 = vmatprep.mubr.bf16.mxu0 %v772
    %887 = vmatmul.mubr.bf16.gmra.mrb[0].mxu0 %v206
    %v888 = vpop.f32.mrb[0].mxu0
    %v889 = vadd.f32 0.0, %v888
    %v890 = vpop.f32.mrb[0].mxu0
    %v891 = vadd.f32 0.0, %v890
    %v892 = vpop.f32.mrb[0].mxu0
    %v893 = vadd.f32 0.0, %v892
    %v894 = vpop.f32.mrb[0].mxu0
    %v895 = vadd.f32 0.0, %v894
    %896 = vmatprep.mubr.bf16.mxu0 %v775
    %897 = vmatmul.mubr.bf16.gmra.mrb[0].mxu0 %v208
    %v898 = vpop.f32.mrb[0].mxu0
    %v899 = vadd.f32 0.0, %v898
    %v900 = vpop.f32.mrb[0].mxu0
    %v901 = vadd.f32 0.0, %v900
    %v902 = vpop.f32.mrb[0].mxu0
    %v903 = vadd.f32 0.0, %v902
    %v904 = vpop.f32.mrb[0].mxu0
    %v905 = vadd.f32 0.0, %v904
    %906 = vmatprep.mubr.bf16.mxu0 %v778
    %907 = vmatmul.mubr.bf16.gmra.mrb[0].mxu0 %v210
    %v908 = vpop.f32.mrb[0].mxu0
    %v909 = vadd.f32 0.0, %v908
    %v910 = vpop.f32.mrb[0].mxu0
    %v911 = vadd.f32 0.0, %v910
    %v912 = vpop.f32.mrb[0].mxu0
    %v913 = vadd.f32 0.0, %v912
    %v914 = vpop.f32.mrb[0].mxu0
    %v915 = vadd.f32 0.0, %v914
    %916 = vmatprep.mubr.bf16.mxu0 %v781
    %917 = vmatmul.mubr.bf16.gmra.mrb[0].mxu0 %v212
    %v918 = vpop.f32.mrb[0].mxu0
    %v919 = vadd.f32 0.0, %v918
    %v920 = vpop.f32.mrb[0].mxu0
    %v921 = vadd.f32 0.0, %v920
    %v922 = vpop.f32.mrb[0].mxu0
    %v923 = vpop.f32.mrb[0].mxu0
    %924 = vdwg.mxu0
    %925 = vmatprep.subr.bf16.mxu0 %v559
    %926 = vmatpush1.bf16.msra.mxu0 %v558
    %927 = vmatprep.subr.bf16.mxu0 %v568
    %928 = vmatpush1.bf16.msra.mxu0 %v567
    %929 = vmatprep.subr.bf16.mxu0 %v577
    %930 = vmatpush1.bf16.msra.mxu0 %v576
    %931 = vmatprep.subr.bf16.mxu0 %v586
    %932 = vmatpush1.bf16.msra.mxu0 %v585
    %933 = vmatprep.subr.bf16.mxu0 %v595
    %934 = vmatpush1.bf16.msra.mxu0 %v594
    %935 = vmatprep.subr.bf16.mxu0 %v604
    %936 = vmatpush1.bf16.msra.mxu0 %v603
    %937 = vmatprep.subr.bf16.mxu0 %v613
    %938 = vmatpush1.bf16.msra.mxu0 %v612
    %939 = vmatprep.subr.bf16.mxu0 %v622
    %940 = vmatpush1.bf16.msra.mxu0 %v621
    %941 = vmatprep.subr.bf16.mxu0 %v631
    %942 = vmatpush1.bf16.msra.mxu0 %v630
    %943 = vmatprep.subr.bf16.mxu0 %v640
    %944 = vmatpush1.bf16.msra.mxu0 %v639
    %945 = vmatprep.subr.bf16.mxu0 %v649
    %946 = vmatpush1.bf16.msra.mxu0 %v648
    %947 = vmatprep.subr.bf16.mxu0 %v658
    %948 = vmatpush1.bf16.msra.mxu0 %v657
    %949 = vmatprep.subr.bf16.mxu0 0
    %950 = vmatpush1.bf16.msra.mxu0 0
    %951 = vmatprep.subr.bf16.mxu0 0
    %952 = vmatpush1.bf16.msra.mxu0 0
    %953 = vmatprep.subr.bf16.mxu0 0
    %954 = vmatpush1.bf16.msra.mxu0 0
    %955 = vmatprep.subr.bf16.mxu0 0
    %956 = vmatpush1.bf16.msra.mxu0 0
    %957 = vmatprep.mubr.bf16.mxu0 %v772
    %958 = vmatmul.mubr.bf16.gmra.mrb[0].mxu0 %v206
    %v959 = vpop.f32.mrb[0].mxu0
    %v960 = vadd.f32 0.0, %v959
    %v961 = vpop.f32.mrb[0].mxu0
    %v962 = vadd.f32 0.0, %v961
    %v963 = vpop.f32.mrb[0].mxu0
    %v964 = vadd.f32 0.0, %v963
    %v965 = vpop.f32.mrb[0].mxu0
    %v966 = vadd.f32 0.0, %v965
    %967 = vmatprep.mubr.bf16.mxu0 %v775
    %968 = vmatmul.mubr.bf16.gmra.mrb[0].mxu0 %v208
    %v969 = vpop.f32.mrb[0].mxu0
    %v970 = vadd.f32 0.0, %v969
    %v971 = vpop.f32.mrb[0].mxu0
    %v972 = vadd.f32 0.0, %v971
    %v973 = vpop.f32.mrb[0].mxu0
    %v974 = vadd.f32 0.0, %v973
    %v975 = vpop.f32.mrb[0].mxu0
    %v976 = vadd.f32 0.0, %v975
    %977 = vmatprep.mubr.bf16.mxu0 %v778
    %978 = vmatmul.mubr.bf16.gmra.mrb[0].mxu0 %v210
    %v979 = vpop.f32.mrb[0].mxu0
    %v980 = vadd.f32 0.0, %v979
    %v981 = vpop.f32.mrb[0].mxu0
    %v982 = vadd.f32 0.0, %v981
    %v983 = vpop.f32.mrb[0].mxu0
    %v984 = vadd.f32 0.0, %v983
    %v985 = vpop.f32.mrb[0].mxu0
    %v986 = vadd.f32 0.0, %v985
    %987 = vmatprep.mubr.bf16.mxu0 %v781
    %988 = vmatmul.mubr.bf16.gmra.mrb[0].mxu0 %v212
    %v989 = vpop.f32.mrb[0].mxu0
    %v990 = vadd.f32 0.0, %v989
    %v991 = vpop.f32.mrb[0].mxu0
    %v992 = vadd.f32 0.0, %v991
    %v993 = vpop.f32.mrb[0].mxu0
    %v994 = vpop.f32.mrb[0].mxu0
    %995 = vdwg.mxu0
    %996 = vmatprep.subr.bf16.mxu0 %v561
    %997 = vmatpush1.bf16.msra.mxu0 %v560
    %998 = vmatprep.subr.bf16.mxu0 %v570
    %999 = vmatpush1.bf16.msra.mxu0 %v569
    %1000 = vmatprep.subr.bf16.mxu0 %v579
    %1001 = vmatpush1.bf16.msra.mxu0 %v578
    %1002 = vmatprep.subr.bf16.mxu0 %v588
    %1003 = vmatpush1.bf16.msra.mxu0 %v587
    %1004 = vmatprep.subr.bf16.mxu0 %v597
    %1005 = vmatpush1.bf16.msra.mxu0 %v596
    %1006 = vmatprep.subr.bf16.mxu0 %v606
    %1007 = vmatpush1.bf16.msra.mxu0 %v605
    %1008 = vmatprep.subr.bf16.mxu0 %v615
    %1009 = vmatpush1.bf16.msra.mxu0 %v614
    %1010 = vmatprep.subr.bf16.mxu0 %v624
    %1011 = vmatpush1.bf16.msra.mxu0 %v623
    %1012 = vmatprep.subr.bf16.mxu0 %v633
    %1013 = vmatpush1.bf16.msra.mxu0 %v632
    %1014 = vmatprep.subr.bf16.mxu0 %v642
    %1015 = vmatpush1.bf16.msra.mxu0 %v641
    %1016 = vmatprep.subr.bf16.mxu0 %v651
    %1017 = vmatpush1.bf16.msra.mxu0 %v650
    %1018 = vmatprep.subr.bf16.mxu0 %v660
    %1019 = vmatpush1.bf16.msra.mxu0 %v659
    %1020 = vmatprep.subr.bf16.mxu0 0
    %1021 = vmatpush1.bf16.msra.mxu0 0
    %1022 = vmatprep.subr.bf16.mxu0 0
    %1023 = vmatpush1.bf16.msra.mxu0 0
    %1024 = vmatprep.subr.bf16.mxu0 0
    %1025 = vmatpush1.bf16.msra.mxu0 0
    %1026 = vmatprep.subr.bf16.mxu0 0
    %1027 = vmatpush1.bf16.msra.mxu0 0
    %1028 = vmatprep.mubr.bf16.mxu0 %v772
    %1029 = vmatmul.mubr.bf16.gmra.mrb[0].mxu0 %v206
    %v1030 = vpop.f32.mrb[0].mxu0
    %v1031 = vadd.f32 0.0, %v1030
    %v1032 = vpop.f32.mrb[0].mxu0
    %v1033 = vadd.f32 0.0, %v1032
    %v1034 = vpop.f32.mrb[0].mxu0
    %v1035 = vadd.f32 0.0, %v1034
    %v1036 = vpop.f32.mrb[0].mxu0
    %v1037 = vadd.f32 0.0, %v1036
    %1038 = vmatprep.mubr.bf16.mxu0 %v775
    %1039 = vmatmul.mubr.bf16.gmra.mrb[0].mxu0 %v208
    %v1040 = vpop.f32.mrb[0].mxu0
    %v1041 = vadd.f32 0.0, %v1040
    %v1042 = vpop.f32.mrb[0].mxu0
    %v1043 = vadd.f32 0.0, %v1042
    %v1044 = vpop.f32.mrb[0].mxu0
    %v1045 = vadd.f32 0.0, %v1044
    %v1046 = vpop.f32.mrb[0].mxu0
    %v1047 = vadd.f32 0.0, %v1046
    %1048 = vmatprep.mubr.bf16.mxu0 %v778
    %1049 = vmatmul.mubr.bf16.gmra.mrb[0].mxu0 %v210
    %v1050 = vpop.f32.mrb[0].mxu0
    %v1051 = vadd.f32 0.0, %v1050
    %v1052 = vpop.f32.mrb[0].mxu0
    %v1053 = vadd.f32 0.0, %v1052
    %v1054 = vpop.f32.mrb[0].mxu0
    %v1055 = vadd.f32 0.0, %v1054
    %v1056 = vpop.f32.mrb[0].mxu0
    %v1057 = vadd.f32 0.0, %v1056
    %1058 = vmatprep.mubr.bf16.mxu0 %v781
    %1059 = vmatmul.mubr.bf16.gmra.mrb[0].mxu0 %v212
    %v1060 = vpop.f32.mrb[0].mxu0
    %v1061 = vadd.f32 0.0, %v1060
    %v1062 = vpop.f32.mrb[0].mxu0
    %v1063 = vadd.f32 0.0, %v1062
    %v1064 = vpop.f32.mrb[0].mxu0
    %v1065 = vpop.f32.mrb[0].mxu0
    %1066 = vdwg.mxu0
    %1067 = vmatprep.subr.bf16.mxu0 0
    %1068 = vmatpush1.bf16.msra.mxu0 %v562
    %1069 = vmatprep.subr.bf16.mxu0 0
    %1070 = vmatpush1.bf16.msra.mxu0 %v571
    %1071 = vmatprep.subr.bf16.mxu0 0
    %1072 = vmatpush1.bf16.msra.mxu0 %v580
    %1073 = vmatprep.subr.bf16.mxu0 0
    %1074 = vmatpush1.bf16.msra.mxu0 %v589
    %1075 = vmatprep.subr.bf16.mxu0 0
    %1076 = vmatpush1.bf16.msra.mxu0 %v598
    %1077 = vmatprep.subr.bf16.mxu0 0
    %1078 = vmatpush1.bf16.msra.mxu0 %v607
    %1079 = vmatprep.subr.bf16.mxu0 0
    %1080 = vmatpush1.bf16.msra.mxu0 %v616
    %1081 = vmatprep.subr.bf16.mxu0 0
    %1082 = vmatpush1.bf16.msra.mxu0 %v625
    %1083 = vmatprep.subr.bf16.mxu0 0
    %1084 = vmatpush1.bf16.msra.mxu0 %v634
    %1085 = vmatprep.subr.bf16.mxu0 0
    %1086 = vmatpush1.bf16.msra.mxu0 %v643
    %1087 = vmatprep.subr.bf16.mxu0 0
    %1088 = vmatpush1.bf16.msra.mxu0 %v652
    %1089 = vmatprep.subr.bf16.mxu0 0
    %1090 = vmatpush1.bf16.msra.mxu0 %v661
    %1091 = vmatprep.subr.bf16.mxu0 0
    %1092 = vmatpush1.bf16.msra.mxu0 0
    %1093 = vmatprep.subr.bf16.mxu0 0
    %1094 = vmatpush1.bf16.msra.mxu0 0
    %1095 = vmatprep.subr.bf16.mxu0 0
    %1096 = vmatpush1.bf16.msra.mxu0 0
    %1097 = vmatprep.subr.bf16.mxu0 0
    %1098 = vmatpush1.bf16.msra.mxu0 0
    %1099 = vmatprep.mubr.bf16.mxu0 %v772
    %1100 = vmatmul.mubr.bf16.gmra.mrb[0].mxu0 %v206
    %v1101 = vpop.f32.mrb[0].mxu0
    %v1102 = vadd.f32 0.0, %v1101
    %v1103 = vpop.f32.mrb[0].mxu0
    %v1104 = vpop.f32.mrb[0].mxu0
    %v1105 = vadd.f32 0.0, %v1104
    %v1106 = vpop.f32.mrb[0].mxu0
    %1107 = vmatprep.mubr.bf16.mxu0 %v775
    %1108 = vmatmul.mubr.bf16.gmra.mrb[0].mxu0 %v208
    %v1109 = vpop.f32.mrb[0].mxu0
    %v1110 = vadd.f32 0.0, %v1109
    %v1111 = vpop.f32.mrb[0].mxu0
    %v1112 = vpop.f32.mrb[0].mxu0
    %v1113 = vadd.f32 0.0, %v1112
    %v1114 = vpop.f32.mrb[0].mxu0
    %1115 = vmatprep.mubr.bf16.mxu0 %v778
    %1116 = vmatmul.mubr.bf16.gmra.mrb[0].mxu0 %v210
    %v1117 = vpop.f32.mrb[0].mxu0
    %v1118 = vadd.f32 0.0, %v1117
    %v1119 = vpop.f32.mrb[0].mxu0
    %v1120 = vpop.f32.mrb[0].mxu0
    %v1121 = vadd.f32 0.0, %v1120
    %v1122 = vpop.f32.mrb[0].mxu0
    %1123 = vmatprep.mubr.bf16.mxu0 %v781
    %1124 = vmatmul.mubr.bf16.gmra.mrb[0].mxu0 %v212
    %v1125 = vpop.f32.mrb[0].mxu0
    %v1126 = vadd.f32 0.0, %v1125
    %v1127 = vpop.f32.mrb[0].mxu0
    %v1128 = vpop.f32.mrb[0].mxu0
    %v1129 = vpop.f32.mrb[0].mxu0
    %1130 = vdwg.mxu0
    %1131 = vst [vmem:[#allocation8] sm:$0xff] %v818
    %1132 = vst [vmem:[#allocation8 + $0x8] sm:$0xff] %v820
    %1133 = vst [vmem:[#allocation8 + $0x10] sm:$0xff] %v889
    %1134 = vst [vmem:[#allocation8 + $0x18] sm:$0xff] %v891
    %1135 = vst [vmem:[#allocation8 + $0x20] sm:$0xff] %v960
    %1136 = vst [vmem:[#allocation8 + $0x28] sm:$0xff] %v962
    %1137 = vst [vmem:[#allocation8 + $0x30] sm:$0xff] %v1031
    %1138 = vst [vmem:[#allocation8 + $0x38] sm:$0xff] %v1033
    %1139 = vst [vmem:[#allocation8 + $0x40] sm:$0xff] %v1102
    %1140 = vst [vmem:[#allocation8 + $0x48] sm:$0xff] %v822
    %1141 = vst [vmem:[#allocation8 + $0x50] sm:$0xff] %v824
    %1142 = vst [vmem:[#allocation8 + $0x58] sm:$0xff] %v893
    %1143 = vst [vmem:[#allocation8 + $0x60] sm:$0xff] %v895
    %1144 = vst [vmem:[#allocation8 + $0x68] sm:$0xff] %v964
    %1145 = vst [vmem:[#allocation8 + $0x70] sm:$0xff] %v966
    %1146 = vst [vmem:[#allocation8 + $0x78] sm:$0xff] %v1035
    %1147 = vst [vmem:[#allocation8 + $0x80] sm:$0xff] %v1037
    %1148 = vst [vmem:[#allocation8 + $0x88] sm:$0xff] %v1105
    %1149 = vst [vmem:[#allocation8 + $0x90] sm:$0xff] %v828
    %1150 = vst [vmem:[#allocation8 + $0x98] sm:$0xff] %v830
    %1151 = vst [vmem:[#allocation8 + $0xa0] sm:$0xff] %v899
    %1152 = vst [vmem:[#allocation8 + $0xa8] sm:$0xff] %v901
    %1153 = vst [vmem:[#allocation8 + $0xb0] sm:$0xff] %v970
    %1154 = vst [vmem:[#allocation8 + $0xb8] sm:$0xff] %v972
    %1155 = vst [vmem:[#allocation8 + $0xc0] sm:$0xff] %v1041
    %1156 = vst [vmem:[#allocation8 + $0xc8] sm:$0xff] %v1043
    %1157 = vst [vmem:[#allocation8 + $0xd0] sm:$0xff] %v1110
    %1158 = vst [vmem:[#allocation8 + $0xd8] sm:$0xff] %v832
    %1159 = vst [vmem:[#allocation8 + $0xe0] sm:$0xff] %v834
    %1160 = vst [vmem:[#allocation8 + $0xe8] sm:$0xff] %v903
    %1161 = vst [vmem:[#allocation8 + $0xf0] sm:$0xff] %v905
    %1162 = vst [vmem:[#allocation8 + $0xf8] sm:$0xff] %v974
    %1163 = vst [vmem:[#allocation8 + $0x100] sm:$0xff] %v976
    %1164 = vst [vmem:[#allocation8 + $0x108] sm:$0xff] %v1045
    %1165 = vst [vmem:[#allocation8 + $0x110] sm:$0xff] %v1047
    %1166 = vst [vmem:[#allocation8 + $0x118] sm:$0xff] %v1113
    %1167 = vst [vmem:[#allocation8 + $0x120] sm:$0xff] %v838
    %1168 = vst [vmem:[#allocation8 + $0x128] sm:$0xff] %v840
    %1169 = vst [vmem:[#allocation8 + $0x130] sm:$0xff] %v909
    %1170 = vst [vmem:[#allocation8 + $0x138] sm:$0xff] %v911
    %1171 = vst [vmem:[#allocation8 + $0x140] sm:$0xff] %v980
    %1172 = vst [vmem:[#allocation8 + $0x148] sm:$0xff] %v982
    %1173 = vst [vmem:[#allocation8 + $0x150] sm:$0xff] %v1051
    %1174 = vst [vmem:[#allocation8 + $0x158] sm:$0xff] %v1053
    %1175 = vst [vmem:[#allocation8 + $0x160] sm:$0xff] %v1118
    %1176 = vst [vmem:[#allocation8 + $0x168] sm:$0xff] %v842
    %1177 = vst [vmem:[#allocation8 + $0x170] sm:$0xff] %v844
    %1178 = vst [vmem:[#allocation8 + $0x178] sm:$0xff] %v913
    %1179 = vst [vmem:[#allocation8 + $0x180] sm:$0xff] %v915
    %1180 = vst [vmem:[#allocation8 + $0x188] sm:$0xff] %v984
    %1181 = vst [vmem:[#allocation8 + $0x190] sm:$0xff] %v986
    %1182 = vst [vmem:[#allocation8 + $0x198] sm:$0xff] %v1055
    %1183 = vst [vmem:[#allocation8 + $0x1a0] sm:$0xff] %v1057
    %1184 = vst [vmem:[#allocation8 + $0x1a8] sm:$0xff] %v1121
    %1185 = vst [vmem:[#allocation8 + $0x1b0] sm:$0x1] %v848
    %1186 = vst [vmem:[#allocation8 + $0x1b8] sm:$0x1] %v850
    %1187 = vst [vmem:[#allocation8 + $0x1c0] sm:$0x1] %v919
    %1188 = vst [vmem:[#allocation8 + $0x1c8] sm:$0x1] %v921
    %1189 = vst [vmem:[#allocation8 + $0x1d0] sm:$0x1] %v990
    %1190 = vst [vmem:[#allocation8 + $0x1d8] sm:$0x1] %v992
    %1191 = vst [vmem:[#allocation8 + $0x1e0] sm:$0x1] %v1061
    %1192 = vst [vmem:[#allocation8 + $0x1e8] sm:$0x1] %v1063
    %1193 = vst [vmem:[#allocation8 + $0x1f0] sm:$0x1] %v1126
    %v1194 = vld [vmem:[#allocation8] sm:$0xff]
    %v1195 = vld [vmem:[#allocation8 + $0x8] sm:$0xff]
    %v1196 = vld [vmem:[#allocation8 + $0x10] sm:$0xff]
    %v1197 = vld [vmem:[#allocation8 + $0x18] sm:$0xff]
    %v1198 = vld [vmem:[#allocation8 + $0x20] sm:$0xff]
    %v1199 = vld [vmem:[#allocation8 + $0x28] sm:$0xff]
    %v1200 = vld [vmem:[#allocation8 + $0x30] sm:$0xff]
    %v1201 = vld [vmem:[#allocation8 + $0x38] sm:$0xff]
    %v1202 = vld [vmem:[#allocation8 + $0x40] sm:$0xff]
    %v1203 = vld [vmem:[#allocation8 + $0x48] sm:$0xff]
    %v1204 = vld [vmem:[#allocation8 + $0x50] sm:$0xff]
    %v1205 = vld [vmem:[#allocation8 + $0x58] sm:$0xff]
    %v1206 = vld [vmem:[#allocation8 + $0x60] sm:$0xff]
    %v1207 = vld [vmem:[#allocation8 + $0x68] sm:$0xff]
    %v1208 = vld [vmem:[#allocation8 + $0x70] sm:$0xff]
    %v1209 = vld [vmem:[#allocation8 + $0x78] sm:$0xff]
    %v1210 = vld [vmem:[#allocation8 + $0x80] sm:$0xff]
    %v1211 = vld [vmem:[#allocation8 + $0x88] sm:$0xff]
    %v1212 = vld [vmem:[#allocation8 + $0x90] sm:$0xff]
    %v1213 = vld [vmem:[#allocation8 + $0x98] sm:$0xff]
    %v1214 = vld [vmem:[#allocation8 + $0xa0] sm:$0xff]
    %v1215 = vld [vmem:[#allocation8 + $0xa8] sm:$0xff]
    %v1216 = vld [vmem:[#allocation8 + $0xb0] sm:$0xff]
    %v1217 = vld [vmem:[#allocation8 + $0xb8] sm:$0xff]
    %v1218 = vld [vmem:[#allocation8 + $0xc0] sm:$0xff]
    %v1219 = vld [vmem:[#allocation8 + $0xc8] sm:$0xff]
    %v1220 = vld [vmem:[#allocation8 + $0xd0] sm:$0xff]
    %v1221 = vld [vmem:[#allocation8 + $0xd8] sm:$0xff]
    %v1222 = vld [vmem:[#allocation8 + $0xe0] sm:$0xff]
    %v1223 = vld [vmem:[#allocation8 + $0xe8] sm:$0xff]
    %v1224 = vld [vmem:[#allocation8 + $0xf0] sm:$0xff]
    %v1225 = vld [vmem:[#allocation8 + $0xf8] sm:$0xff]
    %v1226 = vld [vmem:[#allocation8 + $0x100] sm:$0xff]
    %v1227 = vld [vmem:[#allocation8 + $0x108] sm:$0xff]
    %v1228 = vld [vmem:[#allocation8 + $0x110] sm:$0xff]
    %v1229 = vld [vmem:[#allocation8 + $0x118] sm:$0xff]
    %v1230 = vld [vmem:[#allocation8 + $0x120] sm:$0xff]
    %v1231 = vld [vmem:[#allocation8 + $0x128] sm:$0xff]
    %v1232 = vld [vmem:[#allocation8 + $0x130] sm:$0xff]
    %v1233 = vld [vmem:[#allocation8 + $0x138] sm:$0xff]
    %v1234 = vld [vmem:[#allocation8 + $0x140] sm:$0xff]
    %v1235 = vld [vmem:[#allocation8 + $0x148] sm:$0xff]
    %v1236 = vld [vmem:[#allocation8 + $0x150] sm:$0xff]
    %v1237 = vld [vmem:[#allocation8 + $0x158] sm:$0xff]
    %v1238 = vld [vmem:[#allocation8 + $0x160] sm:$0xff]
    %v1239 = vld [vmem:[#allocation8 + $0x168] sm:$0xff]
    %v1240 = vld [vmem:[#allocation8 + $0x170] sm:$0xff]
    %v1241 = vld [vmem:[#allocation8 + $0x178] sm:$0xff]
    %v1242 = vld [vmem:[#allocation8 + $0x180] sm:$0xff]
    %v1243 = vld [vmem:[#allocation8 + $0x188] sm:$0xff]
    %v1244 = vld [vmem:[#allocation8 + $0x190] sm:$0xff]
    %v1245 = vld [vmem:[#allocation8 + $0x198] sm:$0xff]
    %v1246 = vld [vmem:[#allocation8 + $0x1a0] sm:$0xff]
    %v1247 = vld [vmem:[#allocation8 + $0x1a8] sm:$0xff]
    %v1248 = vld [vmem:[#allocation8 + $0x1b0] sm:$0x1]
    %v1249 = vld [vmem:[#allocation8 + $0x1b8] sm:$0x1]
    %v1250 = vld [vmem:[#allocation8 + $0x1c0] sm:$0x1]
    %v1251 = vld [vmem:[#allocation8 + $0x1c8] sm:$0x1]
    %v1252 = vld [vmem:[#allocation8 + $0x1d0] sm:$0x1]
    %v1253 = vld [vmem:[#allocation8 + $0x1d8] sm:$0x1]
    %v1254 = vld [vmem:[#allocation8 + $0x1e0] sm:$0x1]
    %v1255 = vld [vmem:[#allocation8 + $0x1e8] sm:$0x1]
    %v1256 = vld [vmem:[#allocation8 + $0x1f0] sm:$0x1]
    %v1257 = vadd.f32 %v1194, %v1203
    %v1258 = vadd.f32 %v1257, %v1212
    %v1259 = vadd.f32 %v1258, %v1221
    %v1260 = vadd.f32 %v1259, %v1230
    %v1261 = vadd.f32 %v1260, %v1239
    %vm1262 = vcmask 1040384
    %v1263 = vsel %vm1262, %v1248, 0.0
    %v1264 = vadd.f32 %v1261, %v1263
    %v1265 = vrot.slane %v1264, 4
    %v1266 = vadd.f32 %v1264, %v1265
    %v1267 = vrot.slane %v1266, 2
    %v1268 = vadd.f32 %v1266, %v1267
    %v1269 = vrot.slane %v1268, 1
    %v1270 = vadd.f32 %v1268, %v1269
    %v1271 = vadd.f32 %v1195, %v1204
    %v1272 = vadd.f32 %v1271, %v1213
    %v1273 = vadd.f32 %v1272, %v1222
    %v1274 = vadd.f32 %v1273, %v1231
    %v1275 = vadd.f32 %v1274, %v1240
    %v1276 = vsel %vm1262, %v1249, 0.0
    %v1277 = vadd.f32 %v1275, %v1276
    %v1278 = vrot.slane %v1277, 4
    %v1279 = vadd.f32 %v1277, %v1278
    %v1280 = vrot.slane %v1279, 2
    %v1281 = vadd.f32 %v1279, %v1280
    %v1282 = vrot.slane %v1281, 1
    %v1283 = vadd.f32 %v1281, %v1282
    %v1284 = vadd.f32 %v1196, %v1205
    %v1285 = vadd.f32 %v1284, %v1214
    %v1286 = vadd.f32 %v1285, %v1223
    %v1287 = vadd.f32 %v1286, %v1232
    %v1288 = vadd.f32 %v1287, %v1241
    %v1289 = vsel %vm1262, %v1250, 0.0
    %v1290 = vadd.f32 %v1288, %v1289
    %v1291 = vrot.slane %v1290, 4
    %v1292 = vadd.f32 %v1290, %v1291
    %v1293 = vrot.slane %v1292, 2
    %v1294 = vadd.f32 %v1292, %v1293
    %v1295 = vrot.slane %v1294, 1
    %v1296 = vadd.f32 %v1294, %v1295
    %v1297 = vadd.f32 %v1197, %v1206
    %v1298 = vadd.f32 %v1297, %v1215
    %v1299 = vadd.f32 %v1298, %v1224
    %v1300 = vadd.f32 %v1299, %v1233
    %v1301 = vadd.f32 %v1300, %v1242
    %v1302 = vsel %vm1262, %v1251, 0.0
    %v1303 = vadd.f32 %v1301, %v1302
    %v1304 = vrot.slane %v1303, 4
    %v1305 = vadd.f32 %v1303, %v1304
    %v1306 = vrot.slane %v1305, 2
    %v1307 = vadd.f32 %v1305, %v1306
    %v1308 = vrot.slane %v1307, 1
    %v1309 = vadd.f32 %v1307, %v1308
    %v1310 = vadd.f32 %v1198, %v1207
    %v1311 = vadd.f32 %v1310, %v1216
    %v1312 = vadd.f32 %v1311, %v1225
    %v1313 = vadd.f32 %v1312, %v1234
    %v1314 = vadd.f32 %v1313, %v1243
    %v1315 = vsel %vm1262, %v1252, 0.0
    %v1316 = vadd.f32 %v1314, %v1315
    %v1317 = vrot.slane %v1316, 4
    %v1318 = vadd.f32 %v1316, %v1317
    %v1319 = vrot.slane %v1318, 2
    %v1320 = vadd.f32 %v1318, %v1319
    %v1321 = vrot.slane %v1320, 1
    %v1322 = vadd.f32 %v1320, %v1321
    %v1323 = vadd.f32 %v1199, %v1208
    %v1324 = vadd.f32 %v1323, %v1217
    %v1325 = vadd.f32 %v1324, %v1226
    %v1326 = vadd.f32 %v1325, %v1235
    %v1327 = vadd.f32 %v1326, %v1244
    %v1328 = vsel %vm1262, %v1253, 0.0
    %v1329 = vadd.f32 %v1327, %v1328
    %v1330 = vrot.slane %v1329, 4
    %v1331 = vadd.f32 %v1329, %v1330
    %v1332 = vrot.slane %v1331, 2
    %v1333 = vadd.f32 %v1331, %v1332
    %v1334 = vrot.slane %v1333, 1
    %v1335 = vadd.f32 %v1333, %v1334
    %v1336 = vadd.f32 %v1200, %v1209
    %v1337 = vadd.f32 %v1336, %v1218
    %v1338 = vadd.f32 %v1337, %v1227
    %v1339 = vadd.f32 %v1338, %v1236
    %v1340 = vadd.f32 %v1339, %v1245
    %v1341 = vsel %vm1262, %v1254, 0.0
    %v1342 = vadd.f32 %v1340, %v1341
    %v1343 = vrot.slane %v1342, 4
    %v1344 = vadd.f32 %v1342, %v1343
    %v1345 = vrot.slane %v1344, 2
    %v1346 = vadd.f32 %v1344, %v1345
    %v1347 = vrot.slane %v1346, 1
    %v1348 = vadd.f32 %v1346, %v1347
    %v1349 = vadd.f32 %v1201, %v1210
    %v1350 = vadd.f32 %v1349, %v1219
    %v1351 = vadd.f32 %v1350, %v1228
    %v1352 = vadd.f32 %v1351, %v1237
    %v1353 = vadd.f32 %v1352, %v1246
    %v1354 = vsel %vm1262, %v1255, 0.0
    %v1355 = vadd.f32 %v1353, %v1354
    %v1356 = vrot.slane %v1355, 4
    %v1357 = vadd.f32 %v1355, %v1356
    %v1358 = vrot.slane %v1357, 2
    %v1359 = vadd.f32 %v1357, %v1358
    %v1360 = vrot.slane %v1359, 1
    %v1361 = vadd.f32 %v1359, %v1360
    %v1362 = vadd.f32 %v1202, %v1211
    %v1363 = vadd.f32 %v1362, %v1220
    %v1364 = vadd.f32 %v1363, %v1229
    %v1365 = vadd.f32 %v1364, %v1238
    %v1366 = vadd.f32 %v1365, %v1247
    %v1367 = vsel %vm1262, %v1256, 0.0
    %v1368 = vadd.f32 %v1366, %v1367
    %v1369 = vrot.slane %v1368, 4
    %v1370 = vadd.f32 %v1368, %v1369
    %v1371 = vrot.slane %v1370, 2
    %v1372 = vadd.f32 %v1370, %v1371
    %v1373 = vrot.slane %v1372, 1
    %v1374 = vadd.f32 %v1372, %v1373
    %v1375 = vmul.f32 %v1270, 0.020408163
    %v1376 = vmul.f32 %v1283, 0.020408163
    %v1377 = vmul.f32 %v1296, 0.020408163
    %v1378 = vmul.f32 %v1309, 0.020408163
    %v1379 = vmul.f32 %v1322, 0.020408163
    %v1380 = vmul.f32 %v1335, 0.020408163
    %v1381 = vmul.f32 %v1348, 0.020408163
    %v1382 = vmul.f32 %v1361, 0.020408163
    %v1383 = vmul.f32 %v1374, 0.020408163
    %v1384 = vmul.f32 %v1194, %v1194
    %v1385 = vmul.f32 %v1195, %v1195
    %v1386 = vmul.f32 %v1196, %v1196
    %v1387 = vmul.f32 %v1197, %v1197
    %v1388 = vmul.f32 %v1198, %v1198
    %v1389 = vmul.f32 %v1199, %v1199
    %v1390 = vmul.f32 %v1200, %v1200
    %v1391 = vmul.f32 %v1201, %v1201
    %v1392 = vmul.f32 %v1202, %v1202
    %v1393 = vmul.f32 %v1203, %v1203
    %v1394 = vmul.f32 %v1204, %v1204
    %v1395 = vmul.f32 %v1205, %v1205
    %v1396 = vmul.f32 %v1206, %v1206
    %v1397 = vmul.f32 %v1207, %v1207
    %v1398 = vmul.f32 %v1208, %v1208
    %v1399 = vmul.f32 %v1209, %v1209
    %v1400 = vmul.f32 %v1210, %v1210
    %v1401 = vmul.f32 %v1211, %v1211
    %v1402 = vmul.f32 %v1212, %v1212
    %v1403 = vmul.f32 %v1213, %v1213
    %v1404 = vmul.f32 %v1214, %v1214
    %v1405 = vmul.f32 %v1215, %v1215
    %v1406 = vmul.f32 %v1216, %v1216
    %v1407 = vmul.f32 %v1217, %v1217
    %v1408 = vmul.f32 %v1218, %v1218
    %v1409 = vmul.f32 %v1219, %v1219
    %v1410 = vmul.f32 %v1220, %v1220
    %v1411 = vmul.f32 %v1221, %v1221
    %v1412 = vmul.f32 %v1222, %v1222
    %v1413 = vmul.f32 %v1223, %v1223
    %v1414 = vmul.f32 %v1224, %v1224
    %v1415 = vmul.f32 %v1225, %v1225
    %v1416 = vmul.f32 %v1226, %v1226
    %v1417 = vmul.f32 %v1227, %v1227
    %v1418 = vmul.f32 %v1228, %v1228
    %v1419 = vmul.f32 %v1229, %v1229
    %v1420 = vmul.f32 %v1230, %v1230
    %v1421 = vmul.f32 %v1231, %v1231
    %v1422 = vmul.f32 %v1232, %v1232
    %v1423 = vmul.f32 %v1233, %v1233
    %v1424 = vmul.f32 %v1234, %v1234
    %v1425 = vmul.f32 %v1235, %v1235
    %v1426 = vmul.f32 %v1236, %v1236
    %v1427 = vmul.f32 %v1237, %v1237
    %v1428 = vmul.f32 %v1238, %v1238
    %v1429 = vmul.f32 %v1239, %v1239
    %v1430 = vmul.f32 %v1240, %v1240
    %v1431 = vmul.f32 %v1241, %v1241
    %v1432 = vmul.f32 %v1242, %v1242
    %v1433 = vmul.f32 %v1243, %v1243
    %v1434 = vmul.f32 %v1244, %v1244
    %v1435 = vmul.f32 %v1245, %v1245
    %v1436 = vmul.f32 %v1246, %v1246
    %v1437 = vmul.f32 %v1247, %v1247
    %v1438 = vmul.f32 %v1248, %v1248
    %v1439 = vmul.f32 %v1249, %v1249
    %v1440 = vmul.f32 %v1250, %v1250
    %v1441 = vmul.f32 %v1251, %v1251
    %v1442 = vmul.f32 %v1252, %v1252
    %v1443 = vmul.f32 %v1253, %v1253
    %v1444 = vmul.f32 %v1254, %v1254
    %v1445 = vmul.f32 %v1255, %v1255
    %v1446 = vmul.f32 %v1256, %v1256
    %v1447 = vadd.f32 %v1384, %v1393
    %v1448 = vadd.f32 %v1447, %v1402
    %v1449 = vadd.f32 %v1448, %v1411
    %v1450 = vadd.f32 %v1449, %v1420
    %v1451 = vadd.f32 %v1450, %v1429
    %v1452 = vsel %vm1262, %v1438, 0.0
    %v1453 = vadd.f32 %v1451, %v1452
    %v1454 = vrot.slane %v1453, 4
    %v1455 = vadd.f32 %v1453, %v1454
    %v1456 = vrot.slane %v1455, 2
    %v1457 = vadd.f32 %v1455, %v1456
    %v1458 = vrot.slane %v1457, 1
    %v1459 = vadd.f32 %v1457, %v1458
    %v1460 = vadd.f32 %v1385, %v1394
    %v1461 = vadd.f32 %v1460, %v1403
    %v1462 = vadd.f32 %v1461, %v1412
    %v1463 = vadd.f32 %v1462, %v1421
    %v1464 = vadd.f32 %v1463, %v1430
    %v1465 = vsel %vm1262, %v1439, 0.0
    %v1466 = vadd.f32 %v1464, %v1465
    %v1467 = vrot.slane %v1466, 4
    %v1468 = vadd.f32 %v1466, %v1467
    %v1469 = vrot.slane %v1468, 2
    %v1470 = vadd.f32 %v1468, %v1469
    %v1471 = vrot.slane %v1470, 1
    %v1472 = vadd.f32 %v1470, %v1471
    %v1473 = vadd.f32 %v1386, %v1395
    %v1474 = vadd.f32 %v1473, %v1404
    %v1475 = vadd.f32 %v1474, %v1413
    %v1476 = vadd.f32 %v1475, %v1422
    %v1477 = vadd.f32 %v1476, %v1431
    %v1478 = vsel %vm1262, %v1440, 0.0
    %v1479 = vadd.f32 %v1477, %v1478
    %v1480 = vrot.slane %v1479, 4
    %v1481 = vadd.f32 %v1479, %v1480
    %v1482 = vrot.slane %v1481, 2
    %v1483 = vadd.f32 %v1481, %v1482
    %v1484 = vrot.slane %v1483, 1
    %v1485 = vadd.f32 %v1483, %v1484
    %v1486 = vadd.f32 %v1387, %v1396
    %v1487 = vadd.f32 %v1486, %v1405
    %v1488 = vadd.f32 %v1487, %v1414
    %v1489 = vadd.f32 %v1488, %v1423
    %v1490 = vadd.f32 %v1489, %v1432
    %v1491 = vsel %vm1262, %v1441, 0.0
    %v1492 = vadd.f32 %v1490, %v1491
    %v1493 = vrot.slane %v1492, 4
    %v1494 = vadd.f32 %v1492, %v1493
    %v1495 = vrot.slane %v1494, 2
    %v1496 = vadd.f32 %v1494, %v1495
    %v1497 = vrot.slane %v1496, 1
    %v1498 = vadd.f32 %v1496, %v1497
    %v1499 = vadd.f32 %v1388, %v1397
    %v1500 = vadd.f32 %v1499, %v1406
    %v1501 = vadd.f32 %v1500, %v1415
    %v1502 = vadd.f32 %v1501, %v1424
    %v1503 = vadd.f32 %v1502, %v1433
    %v1504 = vsel %vm1262, %v1442, 0.0
    %v1505 = vadd.f32 %v1503, %v1504
    %v1506 = vrot.slane %v1505, 4
    %v1507 = vadd.f32 %v1505, %v1506
    %v1508 = vrot.slane %v1507, 2
    %v1509 = vadd.f32 %v1507, %v1508
    %v1510 = vrot.slane %v1509, 1
    %v1511 = vadd.f32 %v1509, %v1510
    %v1512 = vadd.f32 %v1389, %v1398
    %v1513 = vadd.f32 %v1512, %v1407
    %v1514 = vadd.f32 %v1513, %v1416
    %v1515 = vadd.f32 %v1514, %v1425
    %v1516 = vadd.f32 %v1515, %v1434
    %v1517 = vsel %vm1262, %v1443, 0.0
    %v1518 = vadd.f32 %v1516, %v1517
    %v1519 = vrot.slane %v1518, 4
    %v1520 = vadd.f32 %v1518, %v1519
    %v1521 = vrot.slane %v1520, 2
    %v1522 = vadd.f32 %v1520, %v1521
    %v1523 = vrot.slane %v1522, 1
    %v1524 = vadd.f32 %v1522, %v1523
    %v1525 = vadd.f32 %v1390, %v1399
    %v1526 = vadd.f32 %v1525, %v1408
    %v1527 = vadd.f32 %v1526, %v1417
    %v1528 = vadd.f32 %v1527, %v1426
    %v1529 = vadd.f32 %v1528, %v1435
    %v1530 = vsel %vm1262, %v1444, 0.0
    %v1531 = vadd.f32 %v1529, %v1530
    %v1532 = vrot.slane %v1531, 4
    %v1533 = vadd.f32 %v1531, %v1532
    %v1534 = vrot.slane %v1533, 2
    %v1535 = vadd.f32 %v1533, %v1534
    %v1536 = vrot.slane %v1535, 1
    %v1537 = vadd.f32 %v1535, %v1536
    %v1538 = vadd.f32 %v1391, %v1400
    %v1539 = vadd.f32 %v1538, %v1409
    %v1540 = vadd.f32 %v1539, %v1418
    %v1541 = vadd.f32 %v1540, %v1427
    %v1542 = vadd.f32 %v1541, %v1436
    %v1543 = vsel %vm1262, %v1445, 0.0
    %v1544 = vadd.f32 %v1542, %v1543
    %v1545 = vrot.slane %v1544, 4
    %v1546 = vadd.f32 %v1544, %v1545
    %v1547 = vrot.slane %v1546, 2
    %v1548 = vadd.f32 %v1546, %v1547
    %v1549 = vrot.slane %v1548, 1
    %v1550 = vadd.f32 %v1548, %v1549
    %v1551 = vadd.f32 %v1392, %v1401
    %v1552 = vadd.f32 %v1551, %v1410
    %v1553 = vadd.f32 %v1552, %v1419
    %v1554 = vadd.f32 %v1553, %v1428
    %v1555 = vadd.f32 %v1554, %v1437
    %v1556 = vsel %vm1262, %v1446, 0.0
    %v1557 = vadd.f32 %v1555, %v1556
    %v1558 = vrot.slane %v1557, 4
    %v1559 = vadd.f32 %v1557, %v1558
    %v1560 = vrot.slane %v1559, 2
    %v1561 = vadd.f32 %v1559, %v1560
    %v1562 = vrot.slane %v1561, 1
    %v1563 = vadd.f32 %v1561, %v1562
    %v1564 = vmul.f32 %v1459, 0.020408163
    %v1565 = vmul.f32 %v1472, 0.020408163
    %v1566 = vmul.f32 %v1485, 0.020408163
    %v1567 = vmul.f32 %v1498, 0.020408163
    %v1568 = vmul.f32 %v1511, 0.020408163
    %v1569 = vmul.f32 %v1524, 0.020408163
    %v1570 = vmul.f32 %v1537, 0.020408163
    %v1571 = vmul.f32 %v1550, 0.020408163
    %v1572 = vmul.f32 %v1563, 0.020408163
    %v1573 = vmul.f32 %v1375, %v1375
    %v1574 = vmul.f32 %v1376, %v1376
    %v1575 = vmul.f32 %v1377, %v1377
    %v1576 = vmul.f32 %v1378, %v1378
    %v1577 = vmul.f32 %v1379, %v1379
    %v1578 = vmul.f32 %v1380, %v1380
    %v1579 = vmul.f32 %v1381, %v1381
    %v1580 = vmul.f32 %v1382, %v1382
    %v1581 = vmul.f32 %v1383, %v1383
    %v1582 = vsub.f32 %v1564, %v1573
    %v1583 = vsub.f32 %v1565, %v1574
    %v1584 = vsub.f32 %v1566, %v1575
    %v1585 = vsub.f32 %v1567, %v1576
    %v1586 = vsub.f32 %v1568, %v1577
    %v1587 = vsub.f32 %v1569, %v1578
    %v1588 = vsub.f32 %v1570, %v1579
    %v1589 = vsub.f32 %v1571, %v1580
    %v1590 = vsub.f32 %v1572, %v1581
    %v1591 = vadd.f32 %v1582, 1e-05
    %v1592 = vadd.f32 %v1583, 1e-05
    %v1593 = vadd.f32 %v1584, 1e-05
    %v1594 = vadd.f32 %v1585, 1e-05
    %v1595 = vadd.f32 %v1586, 1e-05
    %v1596 = vadd.f32 %v1587, 1e-05
    %v1597 = vadd.f32 %v1588, 1e-05
    %v1598 = vadd.f32 %v1589, 1e-05
    %v1599 = vadd.f32 %v1590, 1e-05
    %v1600 = vrsqrt.pop %v1591
    %v1601 = vrsqrt.pop %v1592
    %v1602 = vrsqrt.pop %v1593
    %v1603 = vrsqrt.pop %v1594
    %v1604 = vrsqrt.pop %v1595
    %v1605 = vrsqrt.pop %v1596
    %v1606 = vrsqrt.pop %v1597
    %v1607 = vrsqrt.pop %v1598
    %v1608 = vrsqrt.pop %v1599
    %v1609 = vld [vmem:[#allocation7] sm:$0xff]
    %v1610 = vld [vmem:[#allocation7 + $0x8] sm:$0x1]
    %v1620 = vcombine.low %v1600, %v1601
    %v1621 = vcombine.low %v1602, %v1603
    %v1622 = vcombine.low %v1604, %v1605
    %v1623 = vcombine.low %v1606, %v1607
    %v1625 = vunpack.c.l.s4 1966171168
    %v1626 = vunpack.c.0.s8 %v1625
    %v1627 = vlaneseq
    %v1628 = vshrl.u32 %v1627, 7
    %v1629 = vsub.s32 %v1626, %v1628
    %v1630 = vrot.slane %v1620, %v1629
    %v1632 = vunpack.c.l.s4 1966171168
    %v1633 = vunpack.c.0.s8 %v1632
    %v1634 = vlaneseq
    %v1635 = vshrl.u32 %v1634, 7
    %v1636 = vsub.s32 %v1633, %v1635
    %v1637 = vrot.slane %v1621, %v1636
    %v1639 = vunpack.c.l.s4 1966171168
    %v1640 = vunpack.c.0.s8 %v1639
    %v1641 = vlaneseq
    %v1642 = vshrl.u32 %v1641, 7
    %v1643 = vsub.s32 %v1640, %v1642
    %v1644 = vrot.slane %v1622, %v1643
    %v1646 = vunpack.c.l.s4 1966171168
    %v1647 = vunpack.c.0.s8 %v1646
    %v1648 = vlaneseq
    %v1649 = vshrl.u32 %v1648, 7
    %v1650 = vsub.s32 %v1647, %v1649
    %v1651 = vrot.slane %v1623, %v1650
    %v1652 = vcombine.low %v1630, %v1637
    %v1653 = vcombine.low %v1644, %v1651
    %v1655 = vunpack.c.l.s4 1966171168
    %v1656 = vunpack.c.0.s8 %v1655
    %v1657 = vlaneseq
    %v1658 = vshrl.u32 %v1657, 7
    %v1659 = vsub.s32 %v1656, %v1658
    %v1660 = vrot.slane %v1652, %v1659
    %v1662 = vunpack.c.l.s4 1966171168
    %v1663 = vunpack.c.0.s8 %v1662
    %v1664 = vlaneseq
    %v1665 = vshrl.u32 %v1664, 7
    %v1666 = vsub.s32 %v1663, %v1665
    %v1667 = vrot.slane %v1653, %v1666
    %v1668 = vcombine.low %v1660, %v1667
    %v1670 = vunpack.c.l.s4 1966171168
    %v1671 = vunpack.c.0.s8 %v1670
    %v1672 = vlaneseq
    %v1673 = vshrl.u32 %v1672, 7
    %v1674 = vsub.s32 %v1671, %v1673
    %v1675 = vrot.slane %v1608, %v1674
    %v1677 = vunpack.c.l.s4 1966171168
    %v1678 = vunpack.c.0.s8 %v1677
    %v1679 = vlaneseq
    %v1680 = vshrl.u32 %v1679, 7
    %v1681 = vsub.s32 %v1678, %v1680
    %v1682 = vrot.slane %v1675, %v1681
    %v1685 = vmul.f32 %v1609, %v1668
    %v1686 = vmul.f32 %v1610, %v1682
    %v1687 = vld [vmem:[%s3] sm:$0xff]
    %v1688 = vld [vmem:[%s3 + $0x8] sm:$0x1]
    %v1691 = vlaneseq
    %v1692 = vshrl.u32 %v1691, 7
    %v1693 = vsub.s32 0, %v1692
    %v1694 = vrot.slane %v1685, %v1693
    %v1695 = vlaneseq
    %v1696 = vshrl.u32 %v1695, 7
    %v1697 = vsub.s32 1, %v1696
    %v1698 = vrot.slane %v1685, %v1697
    %v1699 = vlaneseq
    %v1700 = vshrl.u32 %v1699, 7
    %v1701 = vsub.s32 2, %v1700
    %v1702 = vrot.slane %v1685, %v1701
    %v1703 = vlaneseq
    %v1704 = vshrl.u32 %v1703, 7
    %v1705 = vsub.s32 3, %v1704
    %v1706 = vrot.slane %v1685, %v1705
    %v1707 = vlaneseq
    %v1708 = vshrl.u32 %v1707, 7
    %v1709 = vsub.s32 4, %v1708
    %v1710 = vrot.slane %v1685, %v1709
    %v1711 = vlaneseq
    %v1712 = vshrl.u32 %v1711, 7
    %v1713 = vsub.s32 5, %v1712
    %v1714 = vrot.slane %v1685, %v1713
    %v1715 = vlaneseq
    %v1716 = vshrl.u32 %v1715, 7
    %v1717 = vsub.s32 6, %v1716
    %v1718 = vrot.slane %v1685, %v1717
    %v1719 = vlaneseq
    %v1720 = vshrl.u32 %v1719, 7
    %v1721 = vsub.s32 7, %v1720
    %v1722 = vrot.slane %v1685, %v1721
    %v1723 = vlaneseq
    %v1724 = vshrl.u32 %v1723, 7
    %v1725 = vsub.s32 0, %v1724
    %v1726 = vrot.slane %v1686, %v1725
    %v1736 = vmul.f32 %v1375, %v1694
    %v1737 = vmul.f32 %v1376, %v1698
    %v1738 = vmul.f32 %v1377, %v1702
    %v1739 = vmul.f32 %v1378, %v1706
    %v1740 = vmul.f32 %v1379, %v1710
    %v1741 = vmul.f32 %v1380, %v1714
    %v1742 = vmul.f32 %v1381, %v1718
    %v1743 = vmul.f32 %v1382, %v1722
    %v1744 = vmul.f32 %v1383, %v1726
    %v1754 = vcombine.low %v1736, %v1737
    %v1755 = vcombine.low %v1738, %v1739
    %v1756 = vcombine.low %v1740, %v1741
    %v1757 = vcombine.low %v1742, %v1743
    %v1759 = vunpack.c.l.s4 1966171168
    %v1760 = vunpack.c.0.s8 %v1759
    %v1761 = vlaneseq
    %v1762 = vshrl.u32 %v1761, 7
    %v1763 = vsub.s32 %v1760, %v1762
    %v1764 = vrot.slane %v1754, %v1763
    %v1766 = vunpack.c.l.s4 1966171168
    %v1767 = vunpack.c.0.s8 %v1766
    %v1768 = vlaneseq
    %v1769 = vshrl.u32 %v1768, 7
    %v1770 = vsub.s32 %v1767, %v1769
    %v1771 = vrot.slane %v1755, %v1770
    %v1773 = vunpack.c.l.s4 1966171168
    %v1774 = vunpack.c.0.s8 %v1773
    %v1775 = vlaneseq
    %v1776 = vshrl.u32 %v1775, 7
    %v1777 = vsub.s32 %v1774, %v1776
    %v1778 = vrot.slane %v1756, %v1777
    %v1780 = vunpack.c.l.s4 1966171168
    %v1781 = vunpack.c.0.s8 %v1780
    %v1782 = vlaneseq
    %v1783 = vshrl.u32 %v1782, 7
    %v1784 = vsub.s32 %v1781, %v1783
    %v1785 = vrot.slane %v1757, %v1784
    %v1786 = vcombine.low %v1764, %v1771
    %v1787 = vcombine.low %v1778, %v1785
    %v1789 = vunpack.c.l.s4 1966171168
    %v1790 = vunpack.c.0.s8 %v1789
    %v1791 = vlaneseq
    %v1792 = vshrl.u32 %v1791, 7
    %v1793 = vsub.s32 %v1790, %v1792
    %v1794 = vrot.slane %v1786, %v1793
    %v1796 = vunpack.c.l.s4 1966171168
    %v1797 = vunpack.c.0.s8 %v1796
    %v1798 = vlaneseq
    %v1799 = vshrl.u32 %v1798, 7
    %v1800 = vsub.s32 %v1797, %v1799
    %v1801 = vrot.slane %v1787, %v1800
    %v1802 = vcombine.low %v1794, %v1801
    %v1804 = vunpack.c.l.s4 1966171168
    %v1805 = vunpack.c.0.s8 %v1804
    %v1806 = vlaneseq
    %v1807 = vshrl.u32 %v1806, 7
    %v1808 = vsub.s32 %v1805, %v1807
    %v1809 = vrot.slane %v1744, %v1808
    %v1811 = vunpack.c.l.s4 1966171168
    %v1812 = vunpack.c.0.s8 %v1811
    %v1813 = vlaneseq
    %v1814 = vshrl.u32 %v1813, 7
    %v1815 = vsub.s32 %v1812, %v1814
    %v1816 = vrot.slane %v1809, %v1815
    %v1819 = vsub.f32 %v1687, %v1802
    %v1820 = vsub.f32 %v1688, %v1816
    %v1821 = vmul.f32 %v1194, %v1694
    %v1822 = vmul.f32 %v1195, %v1698
    %v1823 = vmul.f32 %v1196, %v1702
    %v1824 = vmul.f32 %v1197, %v1706
    %v1825 = vmul.f32 %v1198, %v1710
    %v1826 = vmul.f32 %v1199, %v1714
    %v1827 = vmul.f32 %v1200, %v1718
    %v1828 = vmul.f32 %v1201, %v1722
    %v1829 = vmul.f32 %v1202, %v1726
    %v1830 = vmul.f32 %v1203, %v1694
    %v1831 = vmul.f32 %v1204, %v1698
    %v1832 = vmul.f32 %v1205, %v1702
    %v1833 = vmul.f32 %v1206, %v1706
    %v1834 = vmul.f32 %v1207, %v1710
    %v1835 = vmul.f32 %v1208, %v1714
    %v1836 = vmul.f32 %v1209, %v1718
    %v1837 = vmul.f32 %v1210, %v1722
    %v1838 = vmul.f32 %v1211, %v1726
    %v1839 = vmul.f32 %v1212, %v1694
    %v1840 = vmul.f32 %v1213, %v1698
    %v1841 = vmul.f32 %v1214, %v1702
    %v1842 = vmul.f32 %v1215, %v1706
    %v1843 = vmul.f32 %v1216, %v1710
    %v1844 = vmul.f32 %v1217, %v1714
    %v1845 = vmul.f32 %v1218, %v1718
    %v1846 = vmul.f32 %v1219, %v1722
    %v1847 = vmul.f32 %v1220, %v1726
    %v1848 = vmul.f32 %v1221, %v1694
    %v1849 = vmul.f32 %v1222, %v1698
    %v1850 = vmul.f32 %v1223, %v1702
    %v1851 = vmul.f32 %v1224, %v1706
    %v1852 = vmul.f32 %v1225, %v1710
    %v1853 = vmul.f32 %v1226, %v1714
    %v1854 = vmul.f32 %v1227, %v1718
    %v1855 = vmul.f32 %v1228, %v1722
    %v1856 = vmul.f32 %v1229, %v1726
    %v1857 = vmul.f32 %v1230, %v1694
    %v1858 = vmul.f32 %v1231, %v1698
    %v1859 = vmul.f32 %v1232, %v1702
    %v1860 = vmul.f32 %v1233, %v1706
    %v1861 = vmul.f32 %v1234, %v1710
    %v1862 = vmul.f32 %v1235, %v1714
    %v1863 = vmul.f32 %v1236, %v1718
    %v1864 = vmul.f32 %v1237, %v1722
    %v1865 = vmul.f32 %v1238, %v1726
    %v1866 = vmul.f32 %v1239, %v1694
    %v1867 = vmul.f32 %v1240, %v1698
    %v1868 = vmul.f32 %v1241, %v1702
    %v1869 = vmul.f32 %v1242, %v1706
    %v1870 = vmul.f32 %v1243, %v1710
    %v1871 = vmul.f32 %v1244, %v1714
    %v1872 = vmul.f32 %v1245, %v1718
    %v1873 = vmul.f32 %v1246, %v1722
    %v1874 = vmul.f32 %v1247, %v1726
    %v1875 = vmul.f32 %v1248, %v1694
    %v1876 = vmul.f32 %v1249, %v1698
    %v1877 = vmul.f32 %v1250, %v1702
    %v1878 = vmul.f32 %v1251, %v1706
    %v1879 = vmul.f32 %v1252, %v1710
    %v1880 = vmul.f32 %v1253, %v1714
    %v1881 = vmul.f32 %v1254, %v1718
    %v1882 = vmul.f32 %v1255, %v1722
    %v1883 = vmul.f32 %v1256, %v1726
    %v1886 = vlaneseq
    %v1887 = vshrl.u32 %v1886, 7
    %v1888 = vsub.s32 0, %v1887
    %v1889 = vrot.slane %v1819, %v1888
    %v1890 = vlaneseq
    %v1891 = vshrl.u32 %v1890, 7
    %v1892 = vsub.s32 1, %v1891
    %v1893 = vrot.slane %v1819, %v1892
    %v1894 = vlaneseq
    %v1895 = vshrl.u32 %v1894, 7
    %v1896 = vsub.s32 2, %v1895
    %v1897 = vrot.slane %v1819, %v1896
    %v1898 = vlaneseq
    %v1899 = vshrl.u32 %v1898, 7
    %v1900 = vsub.s32 3, %v1899
    %v1901 = vrot.slane %v1819, %v1900
    %v1902 = vlaneseq
    %v1903 = vshrl.u32 %v1902, 7
    %v1904 = vsub.s32 4, %v1903
    %v1905 = vrot.slane %v1819, %v1904
    %v1906 = vlaneseq
    %v1907 = vshrl.u32 %v1906, 7
    %v1908 = vsub.s32 5, %v1907
    %v1909 = vrot.slane %v1819, %v1908
    %v1910 = vlaneseq
    %v1911 = vshrl.u32 %v1910, 7
    %v1912 = vsub.s32 6, %v1911
    %v1913 = vrot.slane %v1819, %v1912
    %v1914 = vlaneseq
    %v1915 = vshrl.u32 %v1914, 7
    %v1916 = vsub.s32 7, %v1915
    %v1917 = vrot.slane %v1819, %v1916
    %v1918 = vlaneseq
    %v1919 = vshrl.u32 %v1918, 7
    %v1920 = vsub.s32 0, %v1919
    %v1921 = vrot.slane %v1820, %v1920
    %v1931 = vadd.f32 %v1821, %v1889
    %v1932 = vadd.f32 %v1822, %v1893
    %v1933 = vadd.f32 %v1823, %v1897
    %v1934 = vadd.f32 %v1824, %v1901
    %v1935 = vadd.f32 %v1825, %v1905
    %v1936 = vadd.f32 %v1826, %v1909
    %v1937 = vadd.f32 %v1827, %v1913
    %v1938 = vadd.f32 %v1828, %v1917
    %v1939 = vadd.f32 %v1829, %v1921
    %v1940 = vadd.f32 %v1830, %v1889
    %v1941 = vadd.f32 %v1831, %v1893
    %v1942 = vadd.f32 %v1832, %v1897
    %v1943 = vadd.f32 %v1833, %v1901
    %v1944 = vadd.f32 %v1834, %v1905
    %v1945 = vadd.f32 %v1835, %v1909
    %v1946 = vadd.f32 %v1836, %v1913
    %v1947 = vadd.f32 %v1837, %v1917
    %v1948 = vadd.f32 %v1838, %v1921
    %v1949 = vadd.f32 %v1839, %v1889
    %v1950 = vadd.f32 %v1840, %v1893
    %v1951 = vadd.f32 %v1841, %v1897
    %v1952 = vadd.f32 %v1842, %v1901
    %v1953 = vadd.f32 %v1843, %v1905
    %v1954 = vadd.f32 %v1844, %v1909
    %v1955 = vadd.f32 %v1845, %v1913
    %v1956 = vadd.f32 %v1846, %v1917
    %v1957 = vadd.f32 %v1847, %v1921
    %v1958 = vadd.f32 %v1848, %v1889
    %v1959 = vadd.f32 %v1849, %v1893
    %v1960 = vadd.f32 %v1850, %v1897
    %v1961 = vadd.f32 %v1851, %v1901
    %v1962 = vadd.f32 %v1852, %v1905
    %v1963 = vadd.f32 %v1853, %v1909
    %v1964 = vadd.f32 %v1854, %v1913
    %v1965 = vadd.f32 %v1855, %v1917
    %v1966 = vadd.f32 %v1856, %v1921
    %v1967 = vadd.f32 %v1857, %v1889
    %v1968 = vadd.f32 %v1858, %v1893
    %v1969 = vadd.f32 %v1859, %v1897
    %v1970 = vadd.f32 %v1860, %v1901
    %v1971 = vadd.f32 %v1861, %v1905
    %v1972 = vadd.f32 %v1862, %v1909
    %v1973 = vadd.f32 %v1863, %v1913
    %v1974 = vadd.f32 %v1864, %v1917
    %v1975 = vadd.f32 %v1865, %v1921
    %v1976 = vadd.f32 %v1866, %v1889
    %v1977 = vadd.f32 %v1867, %v1893
    %v1978 = vadd.f32 %v1868, %v1897
    %v1979 = vadd.f32 %v1869, %v1901
    %v1980 = vadd.f32 %v1870, %v1905
    %v1981 = vadd.f32 %v1871, %v1909
    %v1982 = vadd.f32 %v1872, %v1913
    %v1983 = vadd.f32 %v1873, %v1917
    %v1984 = vadd.f32 %v1874, %v1921
    %v1985 = vadd.f32 %v1875, %v1889
    %v1986 = vadd.f32 %v1876, %v1893
    %v1987 = vadd.f32 %v1877, %v1897
    %v1988 = vadd.f32 %v1878, %v1901
    %v1989 = vadd.f32 %v1879, %v1905
    %v1990 = vadd.f32 %v1880, %v1909
    %v1991 = vadd.f32 %v1881, %v1913
    %v1992 = vadd.f32 %v1882, %v1917
    %v1993 = vadd.f32 %v1883, %v1921
    %1994 = vst [vmem:[#allocation8] sm:$0xff] %v1931
    %1995 = vst [vmem:[#allocation8 + $0x8] sm:$0xff] %v1932
    %1996 = vst [vmem:[#allocation8 + $0x10] sm:$0xff] %v1933
    %1997 = vst [vmem:[#allocation8 + $0x18] sm:$0xff] %v1934
    %1998 = vst [vmem:[#allocation8 + $0x20] sm:$0xff] %v1935
    %1999 = vst [vmem:[#allocation8 + $0x28] sm:$0xff] %v1936
    %2000 = vst [vmem:[#allocation8 + $0x30] sm:$0xff] %v1937
    %2001 = vst [vmem:[#allocation8 + $0x38] sm:$0xff] %v1938
    %2002 = vst [vmem:[#allocation8 + $0x40] sm:$0xff] %v1939
    %2003 = vst [vmem:[#allocation8 + $0x48] sm:$0xff] %v1940
    %2004 = vst [vmem:[#allocation8 + $0x50] sm:$0xff] %v1941
    %2005 = vst [vmem:[#allocation8 + $0x58] sm:$0xff] %v1942
    %2006 = vst [vmem:[#allocation8 + $0x60] sm:$0xff] %v1943
    %2007 = vst [vmem:[#allocation8 + $0x68] sm:$0xff] %v1944
    %2008 = vst [vmem:[#allocation8 + $0x70] sm:$0xff] %v1945
    %2009 = vst [vmem:[#allocation8 + $0x78] sm:$0xff] %v1946
    %2010 = vst [vmem:[#allocation8 + $0x80] sm:$0xff] %v1947
    %2011 = vst [vmem:[#allocation8 + $0x88] sm:$0xff] %v1948
    %2012 = vst [vmem:[#allocation8 + $0x90] sm:$0xff] %v1949
    %2013 = vst [vmem:[#allocation8 + $0x98] sm:$0xff] %v1950
    %2014 = vst [vmem:[#allocation8 + $0xa0] sm:$0xff] %v1951
    %2015 = vst [vmem:[#allocation8 + $0xa8] sm:$0xff] %v1952
    %2016 = vst [vmem:[#allocation8 + $0xb0] sm:$0xff] %v1953
    %2017 = vst [vmem:[#allocation8 + $0xb8] sm:$0xff] %v1954
    %2018 = vst [vmem:[#allocation8 + $0xc0] sm:$0xff] %v1955
    %2019 = vst [vmem:[#allocation8 + $0xc8] sm:$0xff] %v1956
    %2020 = vst [vmem:[#allocation8 + $0xd0] sm:$0xff] %v1957
    %2021 = vst [vmem:[#allocation8 + $0xd8] sm:$0xff] %v1958
    %2022 = vst [vmem:[#allocation8 + $0xe0] sm:$0xff] %v1959
    %2023 = vst [vmem:[#allocation8 + $0xe8] sm:$0xff] %v1960
    %2024 = vst [vmem:[#allocation8 + $0xf0] sm:$0xff] %v1961
    %2025 = vst [vmem:[#allocation8 + $0xf8] sm:$0xff] %v1962
    %2026 = vst [vmem:[#allocation8 + $0x100] sm:$0xff] %v1963
    %2027 = vst [vmem:[#allocation8 + $0x108] sm:$0xff] %v1964
    %2028 = vst [vmem:[#allocation8 + $0x110] sm:$0xff] %v1965
    %2029 = vst [vmem:[#allocation8 + $0x118] sm:$0xff] %v1966
    %2030 = vst [vmem:[#allocation8 + $0x120] sm:$0xff] %v1967
    %2031 = vst [vmem:[#allocation8 + $0x128] sm:$0xff] %v1968
    %2032 = vst [vmem:[#allocation8 + $0x130] sm:$0xff] %v1969
    %2033 = vst [vmem:[#allocation8 + $0x138] sm:$0xff] %v1970
    %2034 = vst [vmem:[#allocation8 + $0x140] sm:$0xff] %v1971
    %2035 = vst [vmem:[#allocation8 + $0x148] sm:$0xff] %v1972
    %2036 = vst [vmem:[#allocation8 + $0x150] sm:$0xff] %v1973
    %2037 = vst [vmem:[#allocation8 + $0x158] sm:$0xff] %v1974
    %2038 = vst [vmem:[#allocation8 + $0x160] sm:$0xff] %v1975
    %2039 = vst [vmem:[#allocation8 + $0x168] sm:$0xff] %v1976
    %2040 = vst [vmem:[#allocation8 + $0x170] sm:$0xff] %v1977
    %2041 = vst [vmem:[#allocation8 + $0x178] sm:$0xff] %v1978
    %2042 = vst [vmem:[#allocation8 + $0x180] sm:$0xff] %v1979
    %2043 = vst [vmem:[#allocation8 + $0x188] sm:$0xff] %v1980
    %2044 = vst [vmem:[#allocation8 + $0x190] sm:$0xff] %v1981
    %2045 = vst [vmem:[#allocation8 + $0x198] sm:$0xff] %v1982
    %2046 = vst [vmem:[#allocation8 + $0x1a0] sm:$0xff] %v1983
    %2047 = vst [vmem:[#allocation8 + $0x1a8] sm:$0xff] %v1984
    %2048 = vst [vmem:[#allocation8 + $0x1b0] sm:$0x1] %v1985
    %2049 = vst [vmem:[#allocation8 + $0x1b8] sm:$0x1] %v1986
    %2050 = vst [vmem:[#allocation8 + $0x1c0] sm:$0x1] %v1987
    %2051 = vst [vmem:[#allocation8 + $0x1c8] sm:$0x1] %v1988
    %2052 = vst [vmem:[#allocation8 + $0x1d0] sm:$0x1] %v1989
    %2053 = vst [vmem:[#allocation8 + $0x1d8] sm:$0x1] %v1990
    %2054 = vst [vmem:[#allocation8 + $0x1e0] sm:$0x1] %v1991
    %2055 = vst [vmem:[#allocation8 + $0x1e8] sm:$0x1] %v1992
    %2056 = vst [vmem:[#allocation8 + $0x1f0] sm:$0x1] %v1993
    // Predicated region
    $region30: #{tpu_custom_call.1} parent=1 // pred_check
      _
    $region31: #{tpu_custom_call.1} parent=1 // pred_check_branch
      %2058 = sbr.rel (0) target = $region33
    $region32: #{tpu_custom_call.1} parent=1 // pred_region
      %s2060 = ssub.s32 8064, 8064
      %2061 = vsyncadd [#allocation4], %s2060
      %s2062 = sshll.u32 [#allocation8], 4
      %s2063 = int_to_ptr.vmem [resolvable:$true] %s2062
      %2068 = dma.vmem_to_hbm [thread:$0]  %s2063, 8064, %s4, [#allocation4], 1152, 1152, 72
    $region33: #{tpu_custom_call.1} parent=1 // pred_fallthru
      _
    // Predicated region
    $region34: #{tpu_custom_call.1} parent=1 // pred_check
      _
    $region35: #{tpu_custom_call.1} parent=1 // pred_check_branch
      %2070 = sbr.rel (0) target = $region37
    $region36: #{tpu_custom_call.1} parent=1 // pred_region
      %2071 = dma.done [#allocation4], 8064
    $region37: #{tpu_custom_call.1} parent=1 // pred_fallthru
      _
    %2072 = vsyncpa [#allocation3], 1
    %2073 = vsyncpa [#allocation6], 1
    %2074 = vsyncpa [#allocation4], 1

</llo_original>
